<compile_context>
chip_gen: v6e
topology: v6e:2x2x1
jax: 0.10.0
libtpu: 0.0.40
codegen_flags: <defaults>
</compile_context>

<pallas_src>
import functools

import jax
import jax.numpy as jnp
from jax.experimental import pallas as pl
from jax.experimental.pallas import tpu as pltpu


HP = 128  # per-gate lane padding: each gate occupies one full 128-lane slot


def _gru_kernel(x_ref, wih_ref, whh_ref, bhn_ref, wout_ref, bout_ref,
                o_ref, gx_ref, *, T, BP):
    # Hoisted input projection (with biases folded in via the ones column of x)
    # for every timestep in a single MXU matmul.  bf16 operands, f32 accum.
    gx_ref[...] = jnp.dot(x_ref[...].astype(jnp.bfloat16), wih_ref[...],
                          preferred_element_type=jnp.float32)  # (T*BP, 3*HP) f32

    whh = whh_ref[...]                                   # (HP, 3*HP) bf16, loaded once
    b_hn = jnp.broadcast_to(bhn_ref[...], (BP, HP))      # broadcast hoisted once
    wout = wout_ref[...]                                 # (1, HP) f32

    # Fully-unrolled recurrence (T small & static).  Per step: one bf16 MXU
    # matmul h @ W_hh_stacked + f32 elementwise gate math; gate slices are
    # 128-lane aligned.  If T ever grows beyond ~32-64, switch to
    # lax.fori_loop(..., unroll=8) with gx_ref[pl.ds(pl.multiple_of(t*BP, 8), BP)].
    h = jnp.zeros((BP, HP), jnp.float32)                 # PyTorch default h0 = 0
    for t in range(T):
        gx = gx_ref[t * BP:(t + 1) * BP, :]              # (BP, 3*HP), static view
        gh = jnp.dot(h.astype(jnp.bfloat16), whh,
                     preferred_element_type=jnp.float32)  # (BP, 3*HP) f32
        r = jax.nn.sigmoid(gx[:, 0:HP] + gh[:, 0:HP])
        z = jax.nn.sigmoid(gx[:, HP:2 * HP] + gh[:, HP:2 * HP])
        n = jnp.tanh(gx[:, 2 * HP:] + r * (gh[:, 2 * HP:] + b_hn))
        h = (1.0 - z) * n + z * h

    # Final Linear(H, 1): VPU multiply + lane reduce (padded wout lanes are 0).
    o_ref[...] = jnp.sum(h * wout, axis=-1, keepdims=True) + bout_ref[0, 0]


def pack_params(params):
    """Fuse + pad + cast the canonical GRU params into the kernel layout.

    Call ONCE at init (outside the per-call path); the returned pytree is what
    the jitted forward consumes.
    """
    wih, whh, bih, bhh, wout, bout = params
    H = whh.shape[-1]

    def pad_lanes(w):  # (rows, H) -> (rows, HP), zero-padded lanes
        return jnp.pad(w, ((0, 0), (0, HP - H)))

    # Combined biases folded into W_ih as an extra row (the constant-1 column
    # of x); gate order (r, z, n).  r/z absorb b_hh; n keeps only b_in.
    bx = jnp.concatenate([pad_lanes(bih[0] + bhh[0]),
                          pad_lanes(bih[1] + bhh[1]),
                          pad_lanes(bih[2])], axis=1)                  # (1, 3*HP)
    wih_cols = jnp.concatenate([pad_lanes(wih[g]) for g in range(3)], axis=1)
    wih_p = jnp.concatenate([wih_cols, bx], axis=0).astype(jnp.bfloat16)  # (IN+1, 3*HP)

    # Stacked hidden weights (HP, 3*HP); padded hidden rows are zero.
    whh_cols = jnp.concatenate([pad_lanes(whh[g]) for g in range(3)], axis=1)
    whh_p = jnp.pad(whh_cols, ((0, HP - H), (0, 0))).astype(jnp.bfloat16)

    bhn_p = pad_lanes(bhh[2])                                          # (1, HP) f32
    wout_row = pad_lanes(wout.T)                                       # (1, HP) f32
    return wih_p, whh_p, bhn_p, wout_row, bout


def gru_model_forward(x, packed):
    """x: (B, T, IN) float32; packed = pack_params(params).  Returns (B, 1) f32."""
    wih_p, whh_p, bhn_p, wout_row, bout = packed
    B, T, IN = x.shape
    BP = ((B + 7) // 8) * 8                                # sublane-aligned batch

    # (B, T, IN) -> (T, BP, IN+1): pad batch to a sublane multiple and append a
    # constant-1 feature column (activates the bias row folded into W_ih).
    # Padded batch rows produce garbage h and are sliced off below.
    x_t = jnp.transpose(x, (1, 0, 2))
    x_aug = jnp.pad(x_t, ((0, 0), (0, BP - B), (0, 1)), constant_values=1.0)
    x_flat = x_aug.reshape(T * BP, IN + 1)

    kernel = functools.partial(_gru_kernel, T=T, BP=BP)

    # v7x note: at B=4 a single invocation on one TensorCore is right; only if
    # batch grows to many sublane tiles add a leading "parallel" batch-tile
    # grid axis to engage the second core.
    out = pl.pallas_call(
        kernel,
        out_shape=jax.ShapeDtypeStruct((BP, 1), jnp.float32),
        in_specs=[
            pl.BlockSpec(memory_space=pltpu.MemorySpace.VMEM),   # x_flat (+ones col)
            pl.BlockSpec(memory_space=pltpu.MemorySpace.VMEM),   # W_ih stacked + bias row (bf16)
            pl.BlockSpec(memory_space=pltpu.MemorySpace.VMEM),   # W_hh stacked (bf16)
            pl.BlockSpec(memory_space=pltpu.MemorySpace.VMEM),   # b_hn
            pl.BlockSpec(memory_space=pltpu.MemorySpace.VMEM),   # W_out row (padded)
            pl.BlockSpec(memory_space=pltpu.MemorySpace.SMEM),   # b_out scalar
        ],
        out_specs=pl.BlockSpec(memory_space=pltpu.MemorySpace.VMEM),
        scratch_shapes=[pltpu.VMEM((T * BP, 3 * HP), jnp.float32)],
    )(x_flat, wih_p, whh_p, bhn_p, wout_row, bout)

    return out[:B]


def init_params(key, in_dim, hid_dim):
    """Deterministic init matching torch GRU/Linear shapes (uniform +/- 1/sqrt(H))."""
    k = 1.0 / jnp.sqrt(jnp.float32(hid_dim))
    keys = jax.random.split(key, 6)
    # Stacked gate weights, gate order (r, z, n), already transposed for x @ W.
    wih = jax.random.uniform(keys[0], (3, in_dim, hid_dim), jnp.float32, -k, k)
    whh = jax.random.uniform(keys[1], (3, hid_dim, hid_dim), jnp.float32, -k, k)
    bih = jax.random.uniform(keys[2], (3, 1, hid_dim), jnp.float32, -k, k)
    bhh = jax.random.uniform(keys[3], (3, 1, hid_dim), jnp.float32, -k, k)
    wout = jax.random.uniform(keys[4], (hid_dim, 1), jnp.float32, -k, k)
    bout = jax.random.uniform(keys[5], (1, 1), jnp.float32, -k, k)
    return wih, whh, bih, bhh, wout, bout


def gru_model_reference(x, params):
    """Pure-JAX (f32) reference of the same forward pass, for verification."""
    wih, whh, bih, bhh, wout, bout = params
    B, T, IN = x.shape
    H = whh.shape[-1]
    h = jnp.zeros((B, H), jnp.float32)

    def step(h, x_t):
        r = jax.nn.sigmoid(x_t @ wih[0] + bih[0] + h @ whh[0] + bhh[0])
        z = jax.nn.sigmoid(x_t @ wih[1] + bih[1] + h @ whh[1] + bhh[1])
        n = jnp.tanh(x_t @ wih[2] + bih[2] + r * (h @ whh[2] + bhh[2]))
        h_new = (1.0 - z) * n + z * h
        return h_new, None

    h_final, _ = jax.lax.scan(step, h, jnp.transpose(x, (1, 0, 2)))
    return h_final @ wout + bout


if __name__ == "__main__":
    B, T, IN, H = 4, 8, 8, 50   # small shapes consistent with module defaults

    key = jax.random.PRNGKey(0)
    kx, kp = jax.random.split(key)
    x = jax.random.normal(kx, (B, T, IN), jnp.float32)
    params = init_params(kp, IN, H)

    packed = pack_params(params)              # packed ONCE, outside the hot path
    fwd = jax.jit(gru_model_forward)
    out = jax.block_until_ready(fwd(x, packed))

    ref = gru_model_reference(x, params)
    assert out.shape == (B, 1), out.shape
    # bf16 weight storage (f32 accumulation) vs. the f32 reference drifts at the
    # ~1e-3 level over the T=8 recurrence; both paths use the bf16 MXU anyway.
    assert jnp.allclose(out, ref, rtol=5e-3, atol=5e-3), (out, ref)

    print("KERNEL_OK")
</pallas_src>

<mosaic_0001>
module attributes {stable_mosaic.version = 11 : i64} {
  func.func @_gru_kernel(%arg0: memref<64x9xf32, #tpu.memory_space<vmem>>, %arg1: memref<9x384xbf16, #tpu.memory_space<vmem>>, %arg2: memref<128x384xbf16, #tpu.memory_space<vmem>>, %arg3: memref<1x128xf32, #tpu.memory_space<vmem>>, %arg4: memref<1x128xf32, #tpu.memory_space<vmem>>, %arg5: memref<1x1xf32, #tpu.memory_space<smem>>, %arg6: memref<8x1xf32, #tpu.memory_space<vmem>>, %arg7: memref<64x384xf32, #tpu.memory_space<vmem>>) attributes {dimension_semantics = [], scalar_prefetch = 0 : i64, scratch_operands = 1 : i64, tpu.core_type = #tpu.core_type<tc>} {
    %c0 = arith.constant 0 : index
    %c0_0 = arith.constant 0 : index
    %0 = vector.load %arg0[%c0, %c0_0] : memref<64x9xf32, #tpu.memory_space<vmem>>, vector<64x9xf32>
    %1 = arith.truncf %0 : vector<64x9xf32> to vector<64x9xbf16>
    %c0_1 = arith.constant 0 : index
    %c0_2 = arith.constant 0 : index
    %2 = vector.load %arg1[%c0_1, %c0_2] : memref<9x384xbf16, #tpu.memory_space<vmem>>, vector<9x384xbf16>
    %cst = arith.constant dense<0.000000e+00> : vector<64x384xf32>
    %3 = tpu.matmul %1, %2, %cst {dimension_numbers = #tpu.dot_dimension_numbers<[1], [0], [0], [1], [0, 0, 1, 1], [], []>} : vector<64x9xbf16>, vector<9x384xbf16>, vector<64x384xf32> -> vector<64x384xf32>
    %c0_3 = arith.constant 0 : index
    %c0_4 = arith.constant 0 : index
    %4 = vector.load %arg7[%c0_3, %c0_4] : memref<64x384xf32, #tpu.memory_space<vmem>>, vector<64x384xf32>
    tpu.vector_store %arg7[%c0_3, %c0_4], %3 {strides = array<i32>} : memref<64x384xf32, #tpu.memory_space<vmem>>, vector<64x384xf32>,
    %c0_5 = arith.constant 0 : index
    %c0_6 = arith.constant 0 : index
    %5 = vector.load %arg2[%c0_5, %c0_6] : memref<128x384xbf16, #tpu.memory_space<vmem>>, vector<128x384xbf16>
    %c0_7 = arith.constant 0 : index
    %c0_8 = arith.constant 0 : index
    %6 = vector.load %arg3[%c0_7, %c0_8] : memref<1x128xf32, #tpu.memory_space<vmem>>, vector<1x128xf32>
    %7 = vector.shape_cast %6 : vector<1x128xf32> to vector<1x128xf32>
    %8 = vector.broadcast %7 : vector<1x128xf32> to vector<8x128xf32>
    %c0_9 = arith.constant 0 : index
    %c0_10 = arith.constant 0 : index
    %9 = vector.load %arg4[%c0_9, %c0_10] : memref<1x128xf32, #tpu.memory_space<vmem>>, vector<1x128xf32>
    %cst_11 = arith.constant 0.000000e+00 : f32
    %10 = vector.broadcast %cst_11 : f32 to vector<8x128xf32>
    %c0_12 = arith.constant 0 : index
    %c0_13 = arith.constant 0 : index
    %11 = vector.load %arg7[%c0_12, %c0_13] : memref<64x384xf32, #tpu.memory_space<vmem>>, vector<8x384xf32>
    %12 = arith.truncf %10 : vector<8x128xf32> to vector<8x128xbf16>
    %cst_14 = arith.constant dense<0.000000e+00> : vector<8x384xf32>
    %13 = tpu.matmul %12, %5, %cst_14 {dimension_numbers = #tpu.dot_dimension_numbers<[1], [0], [0], [1], [0, 0, 1, 1], [], []>} : vector<8x128xbf16>, vector<128x384xbf16>, vector<8x384xf32> -> vector<8x384xf32>
    %14 = vector.extract_strided_slice %11 {offsets = [0, 0], sizes = [8, 128], strides = [1, 1]} : vector<8x384xf32> to vector<8x128xf32>
    %15 = vector.extract_strided_slice %13 {offsets = [0, 0], sizes = [8, 128], strides = [1, 1]} : vector<8x384xf32> to vector<8x128xf32>
    %16 = arith.addf %14, %15 : vector<8x128xf32>
    %17 = arith.negf %16 : vector<8x128xf32>
    %18 = math.exp %17 : vector<8x128xf32>
    %cst_15 = arith.constant 1.000000e+00 : f32
    %19 = vector.broadcast %cst_15 : f32 to vector<8x128xf32>
    %20 = arith.addf %19, %18 : vector<8x128xf32>
    %21 = arith.divf %19, %20 : vector<8x128xf32>
    %22 = vector.extract_strided_slice %11 {offsets = [0, 128], sizes = [8, 128], strides = [1, 1]} : vector<8x384xf32> to vector<8x128xf32>
    %23 = vector.extract_strided_slice %13 {offsets = [0, 128], sizes = [8, 128], strides = [1, 1]} : vector<8x384xf32> to vector<8x128xf32>
    %24 = arith.addf %22, %23 : vector<8x128xf32>
    %25 = arith.negf %24 : vector<8x128xf32>
    %26 = math.exp %25 : vector<8x128xf32>
    %cst_16 = arith.constant 1.000000e+00 : f32
    %27 = vector.broadcast %cst_16 : f32 to vector<8x128xf32>
    %28 = arith.addf %27, %26 : vector<8x128xf32>
    %29 = arith.divf %27, %28 : vector<8x128xf32>
    %30 = vector.extract_strided_slice %11 {offsets = [0, 256], sizes = [8, 128], strides = [1, 1]} : vector<8x384xf32> to vector<8x128xf32>
    %31 = vector.extract_strided_slice %13 {offsets = [0, 256], sizes = [8, 128], strides = [1, 1]} : vector<8x384xf32> to vector<8x128xf32>
    %32 = arith.addf %31, %8 : vector<8x128xf32>
    %33 = arith.mulf %21, %32 : vector<8x128xf32>
    %34 = arith.addf %30, %33 : vector<8x128xf32>
    %35 = math.tanh %34 : vector<8x128xf32>
    %cst_17 = arith.constant 1.000000e+00 : f32
    %36 = vector.broadcast %cst_17 : f32 to vector<8x128xf32>
    %37 = arith.subf %36, %29 : vector<8x128xf32>
    %38 = arith.mulf %37, %35 : vector<8x128xf32>
    %39 = arith.mulf %29, %10 : vector<8x128xf32>
    %40 = arith.addf %38, %39 : vector<8x128xf32>
    %c8 = arith.constant 8 : index
    %c0_18 = arith.constant 0 : index
    %41 = vector.load %arg7[%c8, %c0_18] : memref<64x384xf32, #tpu.memory_space<vmem>>, vector<8x384xf32>
    %42 = arith.truncf %40 : vector<8x128xf32> to vector<8x128xbf16>
    %cst_19 = arith.constant dense<0.000000e+00> : vector<8x384xf32>
    %43 = tpu.matmul %42, %5, %cst_19 {dimension_numbers = #tpu.dot_dimension_numbers<[1], [0], [0], [1], [0, 0, 1, 1], [], []>} : vector<8x128xbf16>, vector<128x384xbf16>, vector<8x384xf32> -> vector<8x384xf32>
    %44 = vector.extract_strided_slice %41 {offsets = [0, 0], sizes = [8, 128], strides = [1, 1]} : vector<8x384xf32> to vector<8x128xf32>
    %45 = vector.extract_strided_slice %43 {offsets = [0, 0], sizes = [8, 128], strides = [1, 1]} : vector<8x384xf32> to vector<8x128xf32>
    %46 = arith.addf %44, %45 : vector<8x128xf32>
    %47 = arith.negf %46 : vector<8x128xf32>
    %48 = math.exp %47 : vector<8x128xf32>
    %cst_20 = arith.constant 1.000000e+00 : f32
    %49 = vector.broadcast %cst_20 : f32 to vector<8x128xf32>
    %50 = arith.addf %49, %48 : vector<8x128xf32>
    %51 = arith.divf %49, %50 : vector<8x128xf32>
    %52 = vector.extract_strided_slice %41 {offsets = [0, 128], sizes = [8, 128], strides = [1, 1]} : vector<8x384xf32> to vector<8x128xf32>
    %53 = vector.extract_strided_slice %43 {offsets = [0, 128], sizes = [8, 128], strides = [1, 1]} : vector<8x384xf32> to vector<8x128xf32>
    %54 = arith.addf %52, %53 : vector<8x128xf32>
    %55 = arith.negf %54 : vector<8x128xf32>
    %56 = math.exp %55 : vector<8x128xf32>
    %cst_21 = arith.constant 1.000000e+00 : f32
    %57 = vector.broadcast %cst_21 : f32 to vector<8x128xf32>
    %58 = arith.addf %57, %56 : vector<8x128xf32>
    %59 = arith.divf %57, %58 : vector<8x128xf32>
    %60 = vector.extract_strided_slice %41 {offsets = [0, 256], sizes = [8, 128], strides = [1, 1]} : vector<8x384xf32> to vector<8x128xf32>
    %61 = vector.extract_strided_slice %43 {offsets = [0, 256], sizes = [8, 128], strides = [1, 1]} : vector<8x384xf32> to vector<8x128xf32>
    %62 = arith.addf %61, %8 : vector<8x128xf32>
    %63 = arith.mulf %51, %62 : vector<8x128xf32>
    %64 = arith.addf %60, %63 : vector<8x128xf32>
    %65 = math.tanh %64 : vector<8x128xf32>
    %cst_22 = arith.constant 1.000000e+00 : f32
    %66 = vector.broadcast %cst_22 : f32 to vector<8x128xf32>
    %67 = arith.subf %66, %59 : vector<8x128xf32>
    %68 = arith.mulf %67, %65 : vector<8x128xf32>
    %69 = arith.mulf %59, %40 : vector<8x128xf32>
    %70 = arith.addf %68, %69 : vector<8x128xf32>
    %c16 = arith.constant 16 : index
    %c0_23 = arith.constant 0 : index
    %71 = vector.load %arg7[%c16, %c0_23] : memref<64x384xf32, #tpu.memory_space<vmem>>, vector<8x384xf32>
    %72 = arith.truncf %70 : vector<8x128xf32> to vector<8x128xbf16>
    %cst_24 = arith.constant dense<0.000000e+00> : vector<8x384xf32>
    %73 = tpu.matmul %72, %5, %cst_24 {dimension_numbers = #tpu.dot_dimension_numbers<[1], [0], [0], [1], [0, 0, 1, 1], [], []>} : vector<8x128xbf16>, vector<128x384xbf16>, vector<8x384xf32> -> vector<8x384xf32>
    %74 = vector.extract_strided_slice %71 {offsets = [0, 0], sizes = [8, 128], strides = [1, 1]} : vector<8x384xf32> to vector<8x128xf32>
    %75 = vector.extract_strided_slice %73 {offsets = [0, 0], sizes = [8, 128], strides = [1, 1]} : vector<8x384xf32> to vector<8x128xf32>
    %76 = arith.addf %74, %75 : vector<8x128xf32>
    %77 = arith.negf %76 : vector<8x128xf32>
    %78 = math.exp %77 : vector<8x128xf32>
    %cst_25 = arith.constant 1.000000e+00 : f32
    %79 = vector.broadcast %cst_25 : f32 to vector<8x128xf32>
    %80 = arith.addf %79, %78 : vector<8x128xf32>
    %81 = arith.divf %79, %80 : vector<8x128xf32>
    %82 = vector.extract_strided_slice %71 {offsets = [0, 128], sizes = [8, 128], strides = [1, 1]} : vector<8x384xf32> to vector<8x128xf32>
    %83 = vector.extract_strided_slice %73 {offsets = [0, 128], sizes = [8, 128], strides = [1, 1]} : vector<8x384xf32> to vector<8x128xf32>
    %84 = arith.addf %82, %83 : vector<8x128xf32>
    %85 = arith.negf %84 : vector<8x128xf32>
    %86 = math.exp %85 : vector<8x128xf32>
    %cst_26 = arith.constant 1.000000e+00 : f32
    %87 = vector.broadcast %cst_26 : f32 to vector<8x128xf32>
    %88 = arith.addf %87, %86 : vector<8x128xf32>
    %89 = arith.divf %87, %88 : vector<8x128xf32>
    %90 = vector.extract_strided_slice %71 {offsets = [0, 256], sizes = [8, 128], strides = [1, 1]} : vector<8x384xf32> to vector<8x128xf32>
    %91 = vector.extract_strided_slice %73 {offsets = [0, 256], sizes = [8, 128], strides = [1, 1]} : vector<8x384xf32> to vector<8x128xf32>
    %92 = arith.addf %91, %8 : vector<8x128xf32>
    %93 = arith.mulf %81, %92 : vector<8x128xf32>
    %94 = arith.addf %90, %93 : vector<8x128xf32>
    %95 = math.tanh %94 : vector<8x128xf32>
    %cst_27 = arith.constant 1.000000e+00 : f32
    %96 = vector.broadcast %cst_27 : f32 to vector<8x128xf32>
    %97 = arith.subf %96, %89 : vector<8x128xf32>
    %98 = arith.mulf %97, %95 : vector<8x128xf32>
    %99 = arith.mulf %89, %70 : vector<8x128xf32>
    %100 = arith.addf %98, %99 : vector<8x128xf32>
    %c24 = arith.constant 24 : index
    %c0_28 = arith.constant 0 : index
    %101 = vector.load %arg7[%c24, %c0_28] : memref<64x384xf32, #tpu.memory_space<vmem>>, vector<8x384xf32>
    %102 = arith.truncf %100 : vector<8x128xf32> to vector<8x128xbf16>
    %cst_29 = arith.constant dense<0.000000e+00> : vector<8x384xf32>
    %103 = tpu.matmul %102, %5, %cst_29 {dimension_numbers = #tpu.dot_dimension_numbers<[1], [0], [0], [1], [0, 0, 1, 1], [], []>} : vector<8x128xbf16>, vector<128x384xbf16>, vector<8x384xf32> -> vector<8x384xf32>
    %104 = vector.extract_strided_slice %101 {offsets = [0, 0], sizes = [8, 128], strides = [1, 1]} : vector<8x384xf32> to vector<8x128xf32>
    %105 = vector.extract_strided_slice %103 {offsets = [0, 0], sizes = [8, 128], strides = [1, 1]} : vector<8x384xf32> to vector<8x128xf32>
    %106 = arith.addf %104, %105 : vector<8x128xf32>
    %107 = arith.negf %106 : vector<8x128xf32>
    %108 = math.exp %107 : vector<8x128xf32>
    %cst_30 = arith.constant 1.000000e+00 : f32
    %109 = vector.broadcast %cst_30 : f32 to vector<8x128xf32>
    %110 = arith.addf %109, %108 : vector<8x128xf32>
    %111 = arith.divf %109, %110 : vector<8x128xf32>
    %112 = vector.extract_strided_slice %101 {offsets = [0, 128], sizes = [8, 128], strides = [1, 1]} : vector<8x384xf32> to vector<8x128xf32>
    %113 = vector.extract_strided_slice %103 {offsets = [0, 128], sizes = [8, 128], strides = [1, 1]} : vector<8x384xf32> to vector<8x128xf32>
    %114 = arith.addf %112, %113 : vector<8x128xf32>
    %115 = arith.negf %114 : vector<8x128xf32>
    %116 = math.exp %115 : vector<8x128xf32>
    %cst_31 = arith.constant 1.000000e+00 : f32
    %117 = vector.broadcast %cst_31 : f32 to vector<8x128xf32>
    %118 = arith.addf %117, %116 : vector<8x128xf32>
    %119 = arith.divf %117, %118 : vector<8x128xf32>
    %120 = vector.extract_strided_slice %101 {offsets = [0, 256], sizes = [8, 128], strides = [1, 1]} : vector<8x384xf32> to vector<8x128xf32>
    %121 = vector.extract_strided_slice %103 {offsets = [0, 256], sizes = [8, 128], strides = [1, 1]} : vector<8x384xf32> to vector<8x128xf32>
    %122 = arith.addf %121, %8 : vector<8x128xf32>
    %123 = arith.mulf %111, %122 : vector<8x128xf32>
    %124 = arith.addf %120, %123 : vector<8x128xf32>
    %125 = math.tanh %124 : vector<8x128xf32>
    %cst_32 = arith.constant 1.000000e+00 : f32
    %126 = vector.broadcast %cst_32 : f32 to vector<8x128xf32>
    %127 = arith.subf %126, %119 : vector<8x128xf32>
    %128 = arith.mulf %127, %125 : vector<8x128xf32>
    %129 = arith.mulf %119, %100 : vector<8x128xf32>
    %130 = arith.addf %128, %129 : vector<8x128xf32>
    %c32 = arith.constant 32 : index
    %c0_33 = arith.constant 0 : index
    %131 = vector.load %arg7[%c32, %c0_33] : memref<64x384xf32, #tpu.memory_space<vmem>>, vector<8x384xf32>
    %132 = arith.truncf %130 : vector<8x128xf32> to vector<8x128xbf16>
    %cst_34 = arith.constant dense<0.000000e+00> : vector<8x384xf32>
    %133 = tpu.matmul %132, %5, %cst_34 {dimension_numbers = #tpu.dot_dimension_numbers<[1], [0], [0], [1], [0, 0, 1, 1], [], []>} : vector<8x128xbf16>, vector<128x384xbf16>, vector<8x384xf32> -> vector<8x384xf32>
    %134 = vector.extract_strided_slice %131 {offsets = [0, 0], sizes = [8, 128], strides = [1, 1]} : vector<8x384xf32> to vector<8x128xf32>
    %135 = vector.extract_strided_slice %133 {offsets = [0, 0], sizes = [8, 128], strides = [1, 1]} : vector<8x384xf32> to vector<8x128xf32>
    %136 = arith.addf %134, %135 : vector<8x128xf32>
    %137 = arith.negf %136 : vector<8x128xf32>
    %138 = math.exp %137 : vector<8x128xf32>
    %cst_35 = arith.constant 1.000000e+00 : f32
    %139 = vector.broadcast %cst_35 : f32 to vector<8x128xf32>
    %140 = arith.addf %139, %138 : vector<8x128xf32>
    %141 = arith.divf %139, %140 : vector<8x128xf32>
    %142 = vector.extract_strided_slice %131 {offsets = [0, 128], sizes = [8, 128], strides = [1, 1]} : vector<8x384xf32> to vector<8x128xf32>
    %143 = vector.extract_strided_slice %133 {offsets = [0, 128], sizes = [8, 128], strides = [1, 1]} : vector<8x384xf32> to vector<8x128xf32>
    %144 = arith.addf %142, %143 : vector<8x128xf32>
    %145 = arith.negf %144 : vector<8x128xf32>
    %146 = math.exp %145 : vector<8x128xf32>
    %cst_36 = arith.constant 1.000000e+00 : f32
    %147 = vector.broadcast %cst_36 : f32 to vector<8x128xf32>
    %148 = arith.addf %147, %146 : vector<8x128xf32>
    %149 = arith.divf %147, %148 : vector<8x128xf32>
    %150 = vector.extract_strided_slice %131 {offsets = [0, 256], sizes = [8, 128], strides = [1, 1]} : vector<8x384xf32> to vector<8x128xf32>
    %151 = vector.extract_strided_slice %133 {offsets = [0, 256], sizes = [8, 128], strides = [1, 1]} : vector<8x384xf32> to vector<8x128xf32>
    %152 = arith.addf %151, %8 : vector<8x128xf32>
    %153 = arith.mulf %141, %152 : vector<8x128xf32>
    %154 = arith.addf %150, %153 : vector<8x128xf32>
    %155 = math.tanh %154 : vector<8x128xf32>
    %cst_37 = arith.constant 1.000000e+00 : f32
    %156 = vector.broadcast %cst_37 : f32 to vector<8x128xf32>
    %157 = arith.subf %156, %149 : vector<8x128xf32>
    %158 = arith.mulf %157, %155 : vector<8x128xf32>
    %159 = arith.mulf %149, %130 : vector<8x128xf32>
    %160 = arith.addf %158, %159 : vector<8x128xf32>
    %c40 = arith.constant 40 : index
    %c0_38 = arith.constant 0 : index
    %161 = vector.load %arg7[%c40, %c0_38] : memref<64x384xf32, #tpu.memory_space<vmem>>, vector<8x384xf32>
    %162 = arith.truncf %160 : vector<8x128xf32> to vector<8x128xbf16>
    %cst_39 = arith.constant dense<0.000000e+00> : vector<8x384xf32>
    %163 = tpu.matmul %162, %5, %cst_39 {dimension_numbers = #tpu.dot_dimension_numbers<[1], [0], [0], [1], [0, 0, 1, 1], [], []>} : vector<8x128xbf16>, vector<128x384xbf16>, vector<8x384xf32> -> vector<8x384xf32>
    %164 = vector.extract_strided_slice %161 {offsets = [0, 0], sizes = [8, 128], strides = [1, 1]} : vector<8x384xf32> to vector<8x128xf32>
    %165 = vector.extract_strided_slice %163 {offsets = [0, 0], sizes = [8, 128], strides = [1, 1]} : vector<8x384xf32> to vector<8x128xf32>
    %166 = arith.addf %164, %165 : vector<8x128xf32>
    %167 = arith.negf %166 : vector<8x128xf32>
    %168 = math.exp %167 : vector<8x128xf32>
    %cst_40 = arith.constant 1.000000e+00 : f32
    %169 = vector.broadcast %cst_40 : f32 to vector<8x128xf32>
    %170 = arith.addf %169, %168 : vector<8x128xf32>
    %171 = arith.divf %169, %170 : vector<8x128xf32>
    %172 = vector.extract_strided_slice %161 {offsets = [0, 128], sizes = [8, 128], strides = [1, 1]} : vector<8x384xf32> to vector<8x128xf32>
    %173 = vector.extract_strided_slice %163 {offsets = [0, 128], sizes = [8, 128], strides = [1, 1]} : vector<8x384xf32> to vector<8x128xf32>
    %174 = arith.addf %172, %173 : vector<8x128xf32>
    %175 = arith.negf %174 : vector<8x128xf32>
    %176 = math.exp %175 : vector<8x128xf32>
    %cst_41 = arith.constant 1.000000e+00 : f32
    %177 = vector.broadcast %cst_41 : f32 to vector<8x128xf32>
    %178 = arith.addf %177, %176 : vector<8x128xf32>
    %179 = arith.divf %177, %178 : vector<8x128xf32>
    %180 = vector.extract_strided_slice %161 {offsets = [0, 256], sizes = [8, 128], strides = [1, 1]} : vector<8x384xf32> to vector<8x128xf32>
    %181 = vector.extract_strided_slice %163 {offsets = [0, 256], sizes = [8, 128], strides = [1, 1]} : vector<8x384xf32> to vector<8x128xf32>
    %182 = arith.addf %181, %8 : vector<8x128xf32>
    %183 = arith.mulf %171, %182 : vector<8x128xf32>
    %184 = arith.addf %180, %183 : vector<8x128xf32>
    %185 = math.tanh %184 : vector<8x128xf32>
    %cst_42 = arith.constant 1.000000e+00 : f32
    %186 = vector.broadcast %cst_42 : f32 to vector<8x128xf32>
    %187 = arith.subf %186, %179 : vector<8x128xf32>
    %188 = arith.mulf %187, %185 : vector<8x128xf32>
    %189 = arith.mulf %179, %160 : vector<8x128xf32>
    %190 = arith.addf %188, %189 : vector<8x128xf32>
    %c48 = arith.constant 48 : index
    %c0_43 = arith.constant 0 : index
    %191 = vector.load %arg7[%c48, %c0_43] : memref<64x384xf32, #tpu.memory_space<vmem>>, vector<8x384xf32>
    %192 = arith.truncf %190 : vector<8x128xf32> to vector<8x128xbf16>
    %cst_44 = arith.constant dense<0.000000e+00> : vector<8x384xf32>
    %193 = tpu.matmul %192, %5, %cst_44 {dimension_numbers = #tpu.dot_dimension_numbers<[1], [0], [0], [1], [0, 0, 1, 1], [], []>} : vector<8x128xbf16>, vector<128x384xbf16>, vector<8x384xf32> -> vector<8x384xf32>
    %194 = vector.extract_strided_slice %191 {offsets = [0, 0], sizes = [8, 128], strides = [1, 1]} : vector<8x384xf32> to vector<8x128xf32>
    %195 = vector.extract_strided_slice %193 {offsets = [0, 0], sizes = [8, 128], strides = [1, 1]} : vector<8x384xf32> to vector<8x128xf32>
    %196 = arith.addf %194, %195 : vector<8x128xf32>
    %197 = arith.negf %196 : vector<8x128xf32>
    %198 = math.exp %197 : vector<8x128xf32>
    %cst_45 = arith.constant 1.000000e+00 : f32
    %199 = vector.broadcast %cst_45 : f32 to vector<8x128xf32>
    %200 = arith.addf %199, %198 : vector<8x128xf32>
    %201 = arith.divf %199, %200 : vector<8x128xf32>
    %202 = vector.extract_strided_slice %191 {offsets = [0, 128], sizes = [8, 128], strides = [1, 1]} : vector<8x384xf32> to vector<8x128xf32>
    %203 = vector.extract_strided_slice %193 {offsets = [0, 128], sizes = [8, 128], strides = [1, 1]} : vector<8x384xf32> to vector<8x128xf32>
    %204 = arith.addf %202, %203 : vector<8x128xf32>
    %205 = arith.negf %204 : vector<8x128xf32>
    %206 = math.exp %205 : vector<8x128xf32>
    %cst_46 = arith.constant 1.000000e+00 : f32
    %207 = vector.broadcast %cst_46 : f32 to vector<8x128xf32>
    %208 = arith.addf %207, %206 : vector<8x128xf32>
    %209 = arith.divf %207, %208 : vector<8x128xf32>
    %210 = vector.extract_strided_slice %191 {offsets = [0, 256], sizes = [8, 128], strides = [1, 1]} : vector<8x384xf32> to vector<8x128xf32>
    %211 = vector.extract_strided_slice %193 {offsets = [0, 256], sizes = [8, 128], strides = [1, 1]} : vector<8x384xf32> to vector<8x128xf32>
    %212 = arith.addf %211, %8 : vector<8x128xf32>
    %213 = arith.mulf %201, %212 : vector<8x128xf32>
    %214 = arith.addf %210, %213 : vector<8x128xf32>
    %215 = math.tanh %214 : vector<8x128xf32>
    %cst_47 = arith.constant 1.000000e+00 : f32
    %216 = vector.broadcast %cst_47 : f32 to vector<8x128xf32>
    %217 = arith.subf %216, %209 : vector<8x128xf32>
    %218 = arith.mulf %217, %215 : vector<8x128xf32>
    %219 = arith.mulf %209, %190 : vector<8x128xf32>
    %220 = arith.addf %218, %219 : vector<8x128xf32>
    %c56 = arith.constant 56 : index
    %c0_48 = arith.constant 0 : index
    %221 = vector.load %arg7[%c56, %c0_48] : memref<64x384xf32, #tpu.memory_space<vmem>>, vector<8x384xf32>
    %222 = arith.truncf %220 : vector<8x128xf32> to vector<8x128xbf16>
    %cst_49 = arith.constant dense<0.000000e+00> : vector<8x384xf32>
    %223 = tpu.matmul %222, %5, %cst_49 {dimension_numbers = #tpu.dot_dimension_numbers<[1], [0], [0], [1], [0, 0, 1, 1], [], []>} : vector<8x128xbf16>, vector<128x384xbf16>, vector<8x384xf32> -> vector<8x384xf32>
    %224 = vector.extract_strided_slice %221 {offsets = [0, 0], sizes = [8, 128], strides = [1, 1]} : vector<8x384xf32> to vector<8x128xf32>
    %225 = vector.extract_strided_slice %223 {offsets = [0, 0], sizes = [8, 128], strides = [1, 1]} : vector<8x384xf32> to vector<8x128xf32>
    %226 = arith.addf %224, %225 : vector<8x128xf32>
    %227 = arith.negf %226 : vector<8x128xf32>
    %228 = math.exp %227 : vector<8x128xf32>
    %cst_50 = arith.constant 1.000000e+00 : f32
    %229 = vector.broadcast %cst_50 : f32 to vector<8x128xf32>
    %230 = arith.addf %229, %228 : vector<8x128xf32>
    %231 = arith.divf %229, %230 : vector<8x128xf32>
    %232 = vector.extract_strided_slice %221 {offsets = [0, 128], sizes = [8, 128], strides = [1, 1]} : vector<8x384xf32> to vector<8x128xf32>
    %233 = vector.extract_strided_slice %223 {offsets = [0, 128], sizes = [8, 128], strides = [1, 1]} : vector<8x384xf32> to vector<8x128xf32>
    %234 = arith.addf %232, %233 : vector<8x128xf32>
    %235 = arith.negf %234 : vector<8x128xf32>
    %236 = math.exp %235 : vector<8x128xf32>
    %cst_51 = arith.constant 1.000000e+00 : f32
    %237 = vector.broadcast %cst_51 : f32 to vector<8x128xf32>
    %238 = arith.addf %237, %236 : vector<8x128xf32>
    %239 = arith.divf %237, %238 : vector<8x128xf32>
    %240 = vector.extract_strided_slice %221 {offsets = [0, 256], sizes = [8, 128], strides = [1, 1]} : vector<8x384xf32> to vector<8x128xf32>
    %241 = vector.extract_strided_slice %223 {offsets = [0, 256], sizes = [8, 128], strides = [1, 1]} : vector<8x384xf32> to vector<8x128xf32>
    %242 = arith.addf %241, %8 : vector<8x128xf32>
    %243 = arith.mulf %231, %242 : vector<8x128xf32>
    %244 = arith.addf %240, %243 : vector<8x128xf32>
    %245 = math.tanh %244 : vector<8x128xf32>
    %cst_52 = arith.constant 1.000000e+00 : f32
    %246 = vector.broadcast %cst_52 : f32 to vector<8x128xf32>
    %247 = arith.subf %246, %239 : vector<8x128xf32>
    %248 = arith.mulf %247, %245 : vector<8x128xf32>
    %249 = arith.mulf %239, %220 : vector<8x128xf32>
    %250 = arith.addf %248, %249 : vector<8x128xf32>
    %251 = vector.broadcast %9 : vector<1x128xf32> to vector<8x128xf32>
    %252 = arith.mulf %250, %251 : vector<8x128xf32>
    %cst_53 = arith.constant dense<0.000000e+00> : vector<8xf32>
    %253 = vector.multi_reduction <add>, %252, %cst_53 [1] : vector<8x128xf32> to vector<8xf32>
    %254 = vector.shape_cast %253 : vector<8xf32> to vector<8x1xf32>
    %c0_54 = arith.constant 0 : index
    %c0_55 = arith.constant 0 : index
    %255 = memref.load %arg5[%c0_54, %c0_55] : memref<1x1xf32, #tpu.memory_space<smem>>
    %256 = vector.broadcast %255 : f32 to vector<8x1xf32>
    %257 = arith.addf %254, %256 : vector<8x1xf32>
    %c0_56 = arith.constant 0 : index
    %c0_57 = arith.constant 0 : index
    %258 = vector.load %arg6[%c0_56, %c0_57] : memref<8x1xf32, #tpu.memory_space<vmem>>, vector<8x1xf32>
    tpu.vector_store %arg6[%c0_56, %c0_57], %257 {strides = array<i32>} : memref<8x1xf32, #tpu.memory_space<vmem>>, vector<8x1xf32>,
    return
  }
}

</mosaic_0001>

<llo_original>
// kernel: gru_model_forward.1
$region0: #{gru_model_forward.1}
  #allocation0 [shape = 'u32[]', space=smem, size = 0x4, offset = 0x4, fixed_abs, tag = 'smem constant byte address 0x4 - core index']
  #allocation1 [shape = 'u32[144,128]{1,0:T(1,128)}', space=vmem, size = 0x12000, scoped, tag = 'internal scratch']
  #allocation2 [shape = 'f32[64,384]{1,0:T(8,128)}', space=vmem, size = 0x18000, scoped, tag = 'scratch operand']
  #allocation3 [shape = 'f32[1,1]{1,0:T(1,128)S(6)}', space=smem, size = 0x200, scoped, tag = 'scoped memory for gru_model_forward.1']
  %s0 = inlined_call_operand.vmem [shape: f32[64,9], index: 0, kind: input, shape index: {}]
  %s1 = inlined_call_operand.vmem [shape: bf16[9,384], index: 1, kind: input, shape index: {}]
  %s2 = inlined_call_operand.hbm [shape: bf16[128,384], index: 2, kind: input, shape index: {}]
  %s3 = inlined_call_operand.vmem [shape: f32[1,128], index: 3, kind: input, shape index: {}]
  %s4 = inlined_call_operand.vmem [shape: f32[1,128], index: 4, kind: input, shape index: {}]
  %s5 = inlined_call_operand.<no memory space> [shape: f32[1,1], index: 5, kind: input, shape index: {}]
  %s6 = inlined_call_operand.vmem [shape: f32[8,1], index: 6, kind: output, shape index: {}]
  %s7 = sld [smem:[#allocation0]]
  $region38: #{gru_model_forward.1} parent=0
    _
  %s9 = ssub.s32 1, %s7
  %s10 = scalar_select 0, %s9, %s7
  %11 = sst [smem:[#allocation3]] %s5
  $region1: #{gru_model_forward.1} parent=0
    #allocation4 [shape = 'u8[98304]{0}', space=vmem, size = 0x18000, scoped, tag = 'input window, operand 2, single buffered']
    #allocation5 [shape = 's32[1]{0}', space=sflag, size = 0x4, scoped, tag = 'scoped memory for gru_model_forward.1']
    %12 = vsyncpa [#allocation5], 0
    // Predicated region
    $region2: #{gru_model_forward.1} parent=1 // pred_check
      _
    $region3: #{gru_model_forward.1} parent=1 // pred_check_branch
      %14 = sbr.rel (0) target = $region5
    $region4: #{gru_model_forward.1} parent=1 // pred_region
      _
    $region5: #{gru_model_forward.1} parent=1 // pred_fallthru
      _
    // Predicated region
    $region6: #{gru_model_forward.1} parent=1 // pred_check
      _
    $region7: #{gru_model_forward.1} parent=1 // pred_check_branch
      %16 = sbr.rel (0) target = $region9
    $region8: #{gru_model_forward.1} parent=1 // pred_region
      _
    $region9: #{gru_model_forward.1} parent=1 // pred_fallthru
      _
    // Predicated region
    $region10: #{gru_model_forward.1} parent=1 // pred_check
      _
    $region11: #{gru_model_forward.1} parent=1 // pred_check_branch
      %18 = sbr.rel (0) target = $region13
    $region12: #{gru_model_forward.1} parent=1 // pred_region
      %s20 = ssub.s32 3072, 3072
      %21 = vsyncadd [#allocation5], %s20
      %s22 = sshll.u32 [#allocation4], 4
      %s23 = int_to_ptr.vmem [resolvable:$true] %s22
      %28 = dma.hbm_to_vmem [thread:$0]  %s2, 3072, %s23, [#allocation5], 192, 192, 12
    $region13: #{gru_model_forward.1} parent=1 // pred_fallthru
      _
    // Predicated region
    $region14: #{gru_model_forward.1} parent=1 // pred_check
      _
    $region15: #{gru_model_forward.1} parent=1 // pred_check_branch
      %30 = sbr.rel (0) target = $region17
    $region16: #{gru_model_forward.1} parent=1 // pred_region
      _
    $region17: #{gru_model_forward.1} parent=1 // pred_fallthru
      _
    // Predicated region
    $region18: #{gru_model_forward.1} parent=1 // pred_check
      _
    $region19: #{gru_model_forward.1} parent=1 // pred_check_branch
      %32 = sbr.rel (0) target = $region21
    $region20: #{gru_model_forward.1} parent=1 // pred_region
      _
    $region21: #{gru_model_forward.1} parent=1 // pred_fallthru
      _
    // Predicated region
    $region22: #{gru_model_forward.1} parent=1 // pred_check
      _
    $region23: #{gru_model_forward.1} parent=1 // pred_check_branch
      %34 = sbr.rel (0) target = $region25
    $region24: #{gru_model_forward.1} parent=1 // pred_region
      _
    $region25: #{gru_model_forward.1} parent=1 // pred_fallthru
      _
    // Predicated region
    $region26: #{gru_model_forward.1} parent=1 // pred_check
      _
    $region27: #{gru_model_forward.1} parent=1 // pred_check_branch
      %36 = sbr.rel (0) target = $region29
    $region28: #{gru_model_forward.1} parent=1 // pred_region
      %37 = dma.done [#allocation5], 3072
    $region29: #{gru_model_forward.1} parent=1 // pred_fallthru
      _
    %v39 = vld [vmem:[%s0] sm:$0xff]
    %v40 = vld [vmem:[%s0 + $0x8] sm:$0xff]
    %v41 = vld [vmem:[%s0 + $0x10] sm:$0xff]
    %v42 = vld [vmem:[%s0 + $0x18] sm:$0xff]
    %v43 = vld [vmem:[%s0 + $0x20] sm:$0xff]
    %v44 = vld [vmem:[%s0 + $0x28] sm:$0xff]
    %v45 = vld [vmem:[%s0 + $0x30] sm:$0xff]
    %v46 = vld [vmem:[%s0 + $0x38] sm:$0xff]
    %v47 = vpack.c.bf16 %v40, %v39
    %v48 = vpack.c.bf16 %v42, %v41
    %v49 = vpack.c.bf16 %v44, %v43
    %v50 = vpack.c.bf16 %v46, %v45
    %v51 = vld [vmem:[%s1] sm:$0xff]
    %v52 = vld [vmem:[%s1 + $0x8] sm:$0xf]
    %v53 = vld [vmem:[%s1 + $0xc] sm:$0x11]
    %v54 = vld [vmem:[%s1 + $0x14] sm:$0x1]
    %v59 = vunpack.c.l.b16 %v51
    %v60 = vunpack.c.h.b16 %v51
    %v61 = vunpack.c.l.b16 %v52
    %v62 = vunpack.c.l.b16 %v53
    %v63 = vunpack.c.h.b16 %v53
    %v64 = vunpack.c.l.b16 %v54
    %v65 = vpack.c.b16 %v62, %v59
    %v66 = vpack.c.b16 %v63, %v60
    %v67 = vpack.c.b16 %v64, %v61
    %vm68 = vcmask 72704
    %v70 = vsel %vm68, %v47, 0
    %v73 = vsel %vm68, %v48, 0
    %v76 = vsel %vm68, %v49, 0
    %v79 = vsel %vm68, %v50, 0
    %vm81 = vcmask 1043456
    %vm82 = vcmask 1044480
    %v83 = vsel %vm81, 4294967295, 65535
    %v84 = vsel %vm82, %v83, 0
    %v86 = vand.u32 %v65, %v84
    %v89 = vand.u32 %v66, %v84
    %v92 = vand.u32 %v67, %v84
    %94 = vmatprep.subr.bf16.mxu0 0
    %95 = vmatpush1.bf16.msra.mxu0 0
    %96 = vmatprep.subr.bf16.mxu0 0
    %97 = vmatpush1.bf16.msra.mxu0 0
    %98 = vmatprep.subr.bf16.mxu0 0
    %99 = vmatpush1.bf16.msra.mxu0 0
    %100 = vmatprep.subr.bf16.mxu0 0
    %101 = vmatpush1.bf16.msra.mxu0 0
    %102 = vmatprep.subr.bf16.mxu0 0
    %103 = vmatpush1.bf16.msra.mxu0 0
    %104 = vmatprep.subr.bf16.mxu0 0
    %105 = vmatpush1.bf16.msra.mxu0 0
    %106 = vmatprep.subr.bf16.mxu0 0
    %107 = vmatpush1.bf16.msra.mxu0 0
    %108 = vmatprep.subr.bf16.mxu0 %v89
    %109 = vmatpush1.bf16.msra.mxu0 %v86
    %110 = vmatprep.subr.bf16.mxu0 0
    %111 = vmatpush2.bf16.msra.mxu0 0
    %112 = vmatprep.subr.bf16.mxu0 0
    %113 = vmatpush2.bf16.msra.mxu0 0
    %114 = vmatprep.subr.bf16.mxu0 0
    %115 = vmatpush2.bf16.msra.mxu0 0
    %116 = vmatprep.subr.bf16.mxu0 0
    %117 = vmatpush2.bf16.msra.mxu0 0
    %118 = vmatprep.subr.bf16.mxu0 0
    %119 = vmatpush2.bf16.msra.mxu0 0
    %120 = vmatprep.subr.bf16.mxu0 0
    %121 = vmatpush2.bf16.msra.mxu0 0
    %122 = vmatprep.subr.bf16.mxu0 0
    %123 = vmatpush2.bf16.msra.mxu0 0
    %124 = vmatprep.subr.bf16.mxu0 0
    %125 = vmatpush2.bf16.msra.mxu0 0
    %126 = vmatprep.mubr.bf16.mxu0 0
    %127 = vmatmul.mubr.bf16.gmra.mxu0 %v70
    %v128 = vpop.f32.mrf.mxu0
    %v129 = vadd.f32 0.0, %v128
    %v130 = vpop.f32.mrf.mxu0
    %v131 = vadd.f32 0.0, %v130
    %v132 = vpop.f32.mrf.mxu0
    %v133 = vadd.f32 0.0, %v132
    %v134 = vpop.f32.mrf.mxu0
    %v135 = vadd.f32 0.0, %v134
    %136 = vmatprep.mubr.bf16.mxu0 0
    %137 = vmatmul.mubr.bf16.gmra.mxu0 %v73
    %v138 = vpop.f32.mrf.mxu0
    %v139 = vadd.f32 0.0, %v138
    %v140 = vpop.f32.mrf.mxu0
    %v141 = vadd.f32 0.0, %v140
    %v142 = vpop.f32.mrf.mxu0
    %v143 = vadd.f32 0.0, %v142
    %v144 = vpop.f32.mrf.mxu0
    %v145 = vadd.f32 0.0, %v144
    %146 = vmatprep.mubr.bf16.mxu0 0
    %147 = vmatmul.mubr.bf16.gmra.mxu0 %v76
    %v148 = vpop.f32.mrf.mxu0
    %v149 = vadd.f32 0.0, %v148
    %v150 = vpop.f32.mrf.mxu0
    %v151 = vadd.f32 0.0, %v150
    %v152 = vpop.f32.mrf.mxu0
    %v153 = vadd.f32 0.0, %v152
    %v154 = vpop.f32.mrf.mxu0
    %v155 = vadd.f32 0.0, %v154
    %156 = vmatprep.mubr.bf16.mxu0 0
    %157 = vmatmul.mubr.bf16.gmra.mxu0 %v79
    %v158 = vpop.f32.mrf.mxu0
    %v159 = vadd.f32 0.0, %v158
    %v160 = vpop.f32.mrf.mxu0
    %v161 = vadd.f32 0.0, %v160
    %v162 = vpop.f32.mrf.mxu0
    %v163 = vadd.f32 0.0, %v162
    %v164 = vpop.f32.mrf.mxu0
    %v165 = vadd.f32 0.0, %v164
    %166 = vdwg.mxu0
    %167 = vmatprep.subr.bf16.mxu0 0
    %168 = vmatpush1.bf16.msra.mxu0 0
    %169 = vmatprep.subr.bf16.mxu0 0
    %170 = vmatpush1.bf16.msra.mxu0 0
    %171 = vmatprep.subr.bf16.mxu0 0
    %172 = vmatpush1.bf16.msra.mxu0 0
    %173 = vmatprep.subr.bf16.mxu0 0
    %174 = vmatpush1.bf16.msra.mxu0 0
    %175 = vmatprep.subr.bf16.mxu0 0
    %176 = vmatpush1.bf16.msra.mxu0 0
    %177 = vmatprep.subr.bf16.mxu0 0
    %178 = vmatpush1.bf16.msra.mxu0 0
    %179 = vmatprep.subr.bf16.mxu0 0
    %180 = vmatpush1.bf16.msra.mxu0 0
    %181 = vmatprep.subr.bf16.mxu0 0
    %182 = vmatpush1.bf16.msra.mxu0 %v92
    %183 = vmatprep.subr.bf16.mxu0 0
    %184 = vmatpush2.bf16.msra.mxu0 0
    %185 = vmatprep.subr.bf16.mxu0 0
    %186 = vmatpush2.bf16.msra.mxu0 0
    %187 = vmatprep.subr.bf16.mxu0 0
    %188 = vmatpush2.bf16.msra.mxu0 0
    %189 = vmatprep.subr.bf16.mxu0 0
    %190 = vmatpush2.bf16.msra.mxu0 0
    %191 = vmatprep.subr.bf16.mxu0 0
    %192 = vmatpush2.bf16.msra.mxu0 0
    %193 = vmatprep.subr.bf16.mxu0 0
    %194 = vmatpush2.bf16.msra.mxu0 0
    %195 = vmatprep.subr.bf16.mxu0 0
    %196 = vmatpush2.bf16.msra.mxu0 0
    %197 = vmatprep.subr.bf16.mxu0 0
    %198 = vmatpush2.bf16.msra.mxu0 0
    %199 = vmatprep.mubr.bf16.mxu0 0
    %200 = vmatmul.mubr.bf16.gmra.mxu0 %v70
    %v201 = vpop.f32.mrf.mxu0
    %v202 = vadd.f32 0.0, %v201
    %v203 = vpop.f32.mrf.mxu0
    %v204 = vpop.f32.mrf.mxu0
    %v205 = vadd.f32 0.0, %v204
    %v206 = vpop.f32.mrf.mxu0
    %207 = vmatprep.mubr.bf16.mxu0 0
    %208 = vmatmul.mubr.bf16.gmra.mxu0 %v73
    %v209 = vpop.f32.mrf.mxu0
    %v210 = vadd.f32 0.0, %v209
    %v211 = vpop.f32.mrf.mxu0
    %v212 = vpop.f32.mrf.mxu0
    %v213 = vadd.f32 0.0, %v212
    %v214 = vpop.f32.mrf.mxu0
    %215 = vmatprep.mubr.bf16.mxu0 0
    %216 = vmatmul.mubr.bf16.gmra.mxu0 %v76
    %v217 = vpop.f32.mrf.mxu0
    %v218 = vadd.f32 0.0, %v217
    %v219 = vpop.f32.mrf.mxu0
    %v220 = vpop.f32.mrf.mxu0
    %v221 = vadd.f32 0.0, %v220
    %v222 = vpop.f32.mrf.mxu0
    %223 = vmatprep.mubr.bf16.mxu0 0
    %224 = vmatmul.mubr.bf16.gmra.mxu0 %v79
    %v225 = vpop.f32.mrf.mxu0
    %v226 = vadd.f32 0.0, %v225
    %v227 = vpop.f32.mrf.mxu0
    %v228 = vpop.f32.mrf.mxu0
    %v229 = vadd.f32 0.0, %v228
    %v230 = vpop.f32.mrf.mxu0
    %231 = vdwg.mxu0
    %232 = vst [vmem:[#allocation2] sm:$0xff] %v129
    %233 = vst [vmem:[#allocation2 + $0x8] sm:$0xff] %v131
    %234 = vst [vmem:[#allocation2 + $0x10] sm:$0xff] %v202
    %235 = vst [vmem:[#allocation2 + $0x18] sm:$0xff] %v133
    %236 = vst [vmem:[#allocation2 + $0x20] sm:$0xff] %v135
    %237 = vst [vmem:[#allocation2 + $0x28] sm:$0xff] %v205
    %238 = vst [vmem:[#allocation2 + $0x30] sm:$0xff] %v139
    %239 = vst [vmem:[#allocation2 + $0x38] sm:$0xff] %v141
    %240 = vst [vmem:[#allocation2 + $0x40] sm:$0xff] %v210
    %241 = vst [vmem:[#allocation2 + $0x48] sm:$0xff] %v143
    %242 = vst [vmem:[#allocation2 + $0x50] sm:$0xff] %v145
    %243 = vst [vmem:[#allocation2 + $0x58] sm:$0xff] %v213
    %244 = vst [vmem:[#allocation2 + $0x60] sm:$0xff] %v149
    %245 = vst [vmem:[#allocation2 + $0x68] sm:$0xff] %v151
    %246 = vst [vmem:[#allocation2 + $0x70] sm:$0xff] %v218
    %247 = vst [vmem:[#allocation2 + $0x78] sm:$0xff] %v153
    %248 = vst [vmem:[#allocation2 + $0x80] sm:$0xff] %v155
    %249 = vst [vmem:[#allocation2 + $0x88] sm:$0xff] %v221
    %250 = vst [vmem:[#allocation2 + $0x90] sm:$0xff] %v159
    %251 = vst [vmem:[#allocation2 + $0x98] sm:$0xff] %v161
    %252 = vst [vmem:[#allocation2 + $0xa0] sm:$0xff] %v226
    %253 = vst [vmem:[#allocation2 + $0xa8] sm:$0xff] %v163
    %254 = vst [vmem:[#allocation2 + $0xb0] sm:$0xff] %v165
    %255 = vst [vmem:[#allocation2 + $0xb8] sm:$0xff] %v229
    %v256 = vld [vmem:[#allocation4] sm:$0xff]
    %v257 = vld [vmem:[#allocation4 + $0x8] sm:$0xf]
    %v258 = vld [vmem:[#allocation4 + $0xc] sm:$0xff]
    %v259 = vld [vmem:[#allocation4 + $0x14] sm:$0xf]
    %v260 = vld [vmem:[#allocation4 + $0x18] sm:$0xff]
    %v261 = vld [vmem:[#allocation4 + $0x20] sm:$0xf]
    %v262 = vld [vmem:[#allocation4 + $0x24] sm:$0xff]
    %v263 = vld [vmem:[#allocation4 + $0x2c] sm:$0xf]
    %v264 = vld [vmem:[#allocation4 + $0x30] sm:$0xff]
    %v265 = vld [vmem:[#allocation4 + $0x38] sm:$0xf]
    %v266 = vld [vmem:[#allocation4 + $0x3c] sm:$0xff]
    %v267 = vld [vmem:[#allocation4 + $0x44] sm:$0xf]
    %v268 = vld [vmem:[#allocation4 + $0x48] sm:$0xff]
    %v269 = vld [vmem:[#allocation4 + $0x50] sm:$0xf]
    %v270 = vld [vmem:[#allocation4 + $0x54] sm:$0xff]
    %v271 = vld [vmem:[#allocation4 + $0x5c] sm:$0xf]
    %v272 = vld [vmem:[#allocation4 + $0x60] sm:$0xff]
    %v273 = vld [vmem:[#allocation4 + $0x68] sm:$0xf]
    %v274 = vld [vmem:[#allocation4 + $0x6c] sm:$0xff]
    %v275 = vld [vmem:[#allocation4 + $0x74] sm:$0xf]
    %v276 = vld [vmem:[#allocation4 + $0x78] sm:$0xff]
    %v277 = vld [vmem:[#allocation4 + $0x80] sm:$0xf]
    %v278 = vld [vmem:[#allocation4 + $0x84] sm:$0xff]
    %v279 = vld [vmem:[#allocation4 + $0x8c] sm:$0xf]
    %v280 = vld [vmem:[#allocation4 + $0x90] sm:$0xff]
    %v281 = vld [vmem:[#allocation4 + $0x98] sm:$0xf]
    %v282 = vld [vmem:[#allocation4 + $0x9c] sm:$0xff]
    %v283 = vld [vmem:[#allocation4 + $0xa4] sm:$0xf]
    %v284 = vld [vmem:[#allocation4 + $0xa8] sm:$0xff]
    %v285 = vld [vmem:[#allocation4 + $0xb0] sm:$0xf]
    %v286 = vld [vmem:[#allocation4 + $0xb4] sm:$0xff]
    %v287 = vld [vmem:[#allocation4 + $0xbc] sm:$0xf]
    %v288 = vld [vmem:[%s3] sm:$0x1]
    %v290 = vlaneseq
    %v291 = vshrl.u32 %v290, 7
    %v292 = vsub.s32 0, %v291
    %v293 = vrot.slane %v288, %v292
    %v295 = vld [vmem:[%s4] sm:$0x1]
    %v296 = vld [vmem:[#allocation2] sm:$0xff]
    %v297 = vld [vmem:[#allocation2 + $0x8] sm:$0xff]
    %v298 = vld [vmem:[#allocation2 + $0x10] sm:$0xff]
    %v331 = vunpack.c.l.b16 %v256
    %v332 = vunpack.c.h.b16 %v256
    %v333 = vunpack.c.l.b16 %v257
    %v334 = vunpack.c.l.b16 %v258
    %v335 = vunpack.c.h.b16 %v258
    %v336 = vunpack.c.l.b16 %v259
    %v337 = vunpack.c.l.b16 %v260
    %v338 = vunpack.c.h.b16 %v260
    %v339 = vunpack.c.l.b16 %v261
    %v340 = vunpack.c.l.b16 %v262
    %v341 = vunpack.c.h.b16 %v262
    %v342 = vunpack.c.l.b16 %v263
    %v343 = vunpack.c.l.b16 %v264
    %v344 = vunpack.c.h.b16 %v264
    %v345 = vunpack.c.l.b16 %v265
    %v346 = vunpack.c.l.b16 %v266
    %v347 = vunpack.c.h.b16 %v266
    %v348 = vunpack.c.l.b16 %v267
    %v349 = vunpack.c.l.b16 %v268
    %v350 = vunpack.c.h.b16 %v268
    %v351 = vunpack.c.l.b16 %v269
    %v352 = vunpack.c.l.b16 %v270
    %v353 = vunpack.c.h.b16 %v270
    %v354 = vunpack.c.l.b16 %v271
    %v355 = vunpack.c.l.b16 %v272
    %v356 = vunpack.c.h.b16 %v272
    %v357 = vunpack.c.l.b16 %v273
    %v358 = vunpack.c.l.b16 %v274
    %v359 = vunpack.c.h.b16 %v274
    %v360 = vunpack.c.l.b16 %v275
    %v361 = vunpack.c.l.b16 %v276
    %v362 = vunpack.c.h.b16 %v276
    %v363 = vunpack.c.l.b16 %v277
    %v364 = vunpack.c.l.b16 %v278
    %v365 = vunpack.c.h.b16 %v278
    %v366 = vunpack.c.l.b16 %v279
    %v367 = vunpack.c.l.b16 %v280
    %v368 = vunpack.c.h.b16 %v280
    %v369 = vunpack.c.l.b16 %v281
    %v370 = vunpack.c.l.b16 %v282
    %v371 = vunpack.c.h.b16 %v282
    %v372 = vunpack.c.l.b16 %v283
    %v373 = vunpack.c.l.b16 %v284
    %v374 = vunpack.c.h.b16 %v284
    %v375 = vunpack.c.l.b16 %v285
    %v376 = vunpack.c.l.b16 %v286
    %v377 = vunpack.c.h.b16 %v286
    %v378 = vunpack.c.l.b16 %v287
    %v379 = vpack.c.b16 %v334, %v331
    %v380 = vpack.c.b16 %v335, %v332
    %v381 = vpack.c.b16 %v336, %v333
    %v382 = vpack.c.b16 %v340, %v337
    %v383 = vpack.c.b16 %v341, %v338
    %v384 = vpack.c.b16 %v342, %v339
    %v385 = vpack.c.b16 %v346, %v343
    %v386 = vpack.c.b16 %v347, %v344
    %v387 = vpack.c.b16 %v348, %v345
    %v388 = vpack.c.b16 %v352, %v349
    %v389 = vpack.c.b16 %v353, %v350
    %v390 = vpack.c.b16 %v354, %v351
    %v391 = vpack.c.b16 %v358, %v355
    %v392 = vpack.c.b16 %v359, %v356
    %v393 = vpack.c.b16 %v360, %v357
    %v394 = vpack.c.b16 %v364, %v361
    %v395 = vpack.c.b16 %v365, %v362
    %v396 = vpack.c.b16 %v366, %v363
    %v397 = vpack.c.b16 %v370, %v367
    %v398 = vpack.c.b16 %v371, %v368
    %v399 = vpack.c.b16 %v372, %v369
    %v400 = vpack.c.b16 %v376, %v373
    %v401 = vpack.c.b16 %v377, %v374
    %v402 = vpack.c.b16 %v378, %v375
    %427 = vmatprep.subr.bf16.mxu0 %v401
    %428 = vmatpush1.bf16.msra.mxu0 %v400
    %429 = vmatprep.subr.bf16.mxu0 %v398
    %430 = vmatpush1.bf16.msra.mxu0 %v397
    %431 = vmatprep.subr.bf16.mxu0 %v395
    %432 = vmatpush1.bf16.msra.mxu0 %v394
    %433 = vmatprep.subr.bf16.mxu0 %v392
    %434 = vmatpush1.bf16.msra.mxu0 %v391
    %435 = vmatprep.subr.bf16.mxu0 %v389
    %436 = vmatpush1.bf16.msra.mxu0 %v388
    %437 = vmatprep.subr.bf16.mxu0 %v386
    %438 = vmatpush1.bf16.msra.mxu0 %v385
    %439 = vmatprep.subr.bf16.mxu0 %v383
    %440 = vmatpush1.bf16.msra.mxu0 %v382
    %441 = vmatprep.subr.bf16.mxu0 %v380
    %442 = vmatpush1.bf16.msra.mxu0 %v379
    %443 = vmatprep.subr.bf16.mxu0 0
    %444 = vmatpush2.bf16.msra.mxu0 0
    %445 = vmatprep.subr.bf16.mxu0 0
    %446 = vmatpush2.bf16.msra.mxu0 0
    %447 = vmatprep.subr.bf16.mxu0 0
    %448 = vmatpush2.bf16.msra.mxu0 0
    %449 = vmatprep.subr.bf16.mxu0 0
    %450 = vmatpush2.bf16.msra.mxu0 0
    %451 = vmatprep.subr.bf16.mxu0 0
    %452 = vmatpush2.bf16.msra.mxu0 0
    %453 = vmatprep.subr.bf16.mxu0 0
    %454 = vmatpush2.bf16.msra.mxu0 0
    %455 = vmatprep.subr.bf16.mxu0 0
    %456 = vmatpush2.bf16.msra.mxu0 0
    %457 = vmatprep.subr.bf16.mxu0 0
    %458 = vmatpush2.bf16.msra.mxu0 0
    %459 = vmatprep.mubr.bf16.mxu0 0
    %460 = vmatmul.mubr.bf16.gmra.mxu0 0
    %v461 = vpop.f32.mrf.mxu0
    %v462 = vadd.f32 0.0, %v461
    %v463 = vpop.f32.mrf.mxu0
    %v464 = vadd.f32 0.0, %v463
    %v465 = vpop.f32.mrf.mxu0
    %v466 = vpop.f32.mrf.mxu0
    %467 = vdwg.mxu0
    %468 = vmatprep.subr.bf16.mxu0 0
    %469 = vmatpush1.bf16.msra.mxu0 %v402
    %470 = vmatprep.subr.bf16.mxu0 0
    %471 = vmatpush1.bf16.msra.mxu0 %v399
    %472 = vmatprep.subr.bf16.mxu0 0
    %473 = vmatpush1.bf16.msra.mxu0 %v396
    %474 = vmatprep.subr.bf16.mxu0 0
    %475 = vmatpush1.bf16.msra.mxu0 %v393
    %476 = vmatprep.subr.bf16.mxu0 0
    %477 = vmatpush1.bf16.msra.mxu0 %v390
    %478 = vmatprep.subr.bf16.mxu0 0
    %479 = vmatpush1.bf16.msra.mxu0 %v387
    %480 = vmatprep.subr.bf16.mxu0 0
    %481 = vmatpush1.bf16.msra.mxu0 %v384
    %482 = vmatprep.subr.bf16.mxu0 0
    %483 = vmatpush1.bf16.msra.mxu0 %v381
    %484 = vmatprep.subr.bf16.mxu0 0
    %485 = vmatpush2.bf16.msra.mxu0 0
    %486 = vmatprep.subr.bf16.mxu0 0
    %487 = vmatpush2.bf16.msra.mxu0 0
    %488 = vmatprep.subr.bf16.mxu0 0
    %489 = vmatpush2.bf16.msra.mxu0 0
    %490 = vmatprep.subr.bf16.mxu0 0
    %491 = vmatpush2.bf16.msra.mxu0 0
    %492 = vmatprep.subr.bf16.mxu0 0
    %493 = vmatpush2.bf16.msra.mxu0 0
    %494 = vmatprep.subr.bf16.mxu0 0
    %495 = vmatpush2.bf16.msra.mxu0 0
    %496 = vmatprep.subr.bf16.mxu0 0
    %497 = vmatpush2.bf16.msra.mxu0 0
    %498 = vmatprep.subr.bf16.mxu0 0
    %499 = vmatpush2.bf16.msra.mxu0 0
    %500 = vmatprep.mubr.bf16.mxu0 0
    %501 = vmatmul.mubr.bf16.gmra.mxu0 0
    %v502 = vpop.f32.mrf.mxu0
    %v503 = vadd.f32 0.0, %v502
    %v504 = vpop.f32.mrf.mxu0
    %v505 = vpop.f32.mrf.mxu0
    %v506 = vpop.f32.mrf.mxu0
    %507 = vdwg.mxu0
    %v508 = vadd.f32 %v296, %v462
    %v509 = vxor.u32 %v508, 2147483648
    %v510 = vmul.f32 %v509, 1.442695
    %v511 = vpow.pop %v510
    %v512 = vadd.f32 %v511, 1.0
    %v513 = vrcp.pop %v512
    %v514 = vmul.f32 1.0, %v513
    %v515 = vadd.f32 %v297, %v464
    %v516 = vxor.u32 %v515, 2147483648
    %v517 = vmul.f32 %v516, 1.442695
    %v518 = vpow.pop %v517
    %v519 = vadd.f32 %v518, 1.0
    %v520 = vrcp.pop %v519
    %v521 = vmul.f32 1.0, %v520
    %v522 = vadd.f32 %v503, %v293
    %v523 = vmul.f32 %v514, %v522
    %v524 = vadd.f32 %v298, %v523
    %v525 = vtanh.pop %v524
    %v526 = vsub.f32 1.0, %v521
    %v527 = vmul.f32 %v526, %v525
    %v528 = vmul.f32 %v521, 0.0
    %v529 = vadd.f32 %v527, %v528
    %v530 = vld [vmem:[#allocation2 + $0x18] sm:$0xff]
    %v531 = vld [vmem:[#allocation2 + $0x20] sm:$0xff]
    %v532 = vld [vmem:[#allocation2 + $0x28] sm:$0xff]
    %v533 = vpack.c.bf16 %v529, %v529
    %534 = vmatprep.subr.bf16.mxu0 %v401
    %535 = vmatpush1.bf16.msra.mxu0 %v400
    %536 = vmatprep.subr.bf16.mxu0 %v398
    %537 = vmatpush1.bf16.msra.mxu0 %v397
    %538 = vmatprep.subr.bf16.mxu0 %v395
    %539 = vmatpush1.bf16.msra.mxu0 %v394
    %540 = vmatprep.subr.bf16.mxu0 %v392
    %541 = vmatpush1.bf16.msra.mxu0 %v391
    %542 = vmatprep.subr.bf16.mxu0 %v389
    %543 = vmatpush1.bf16.msra.mxu0 %v388
    %544 = vmatprep.subr.bf16.mxu0 %v386
    %545 = vmatpush1.bf16.msra.mxu0 %v385
    %546 = vmatprep.subr.bf16.mxu0 %v383
    %547 = vmatpush1.bf16.msra.mxu0 %v382
    %548 = vmatprep.subr.bf16.mxu0 %v380
    %549 = vmatpush1.bf16.msra.mxu0 %v379
    %550 = vmatprep.subr.bf16.mxu0 0
    %551 = vmatpush2.bf16.msra.mxu0 0
    %552 = vmatprep.subr.bf16.mxu0 0
    %553 = vmatpush2.bf16.msra.mxu0 0
    %554 = vmatprep.subr.bf16.mxu0 0
    %555 = vmatpush2.bf16.msra.mxu0 0
    %556 = vmatprep.subr.bf16.mxu0 0
    %557 = vmatpush2.bf16.msra.mxu0 0
    %558 = vmatprep.subr.bf16.mxu0 0
    %559 = vmatpush2.bf16.msra.mxu0 0
    %560 = vmatprep.subr.bf16.mxu0 0
    %561 = vmatpush2.bf16.msra.mxu0 0
    %562 = vmatprep.subr.bf16.mxu0 0
    %563 = vmatpush2.bf16.msra.mxu0 0
    %564 = vmatprep.subr.bf16.mxu0 0
    %565 = vmatpush2.bf16.msra.mxu0 0
    %566 = vmatprep.mubr.bf16.mxu0 0
    %567 = vmatmul.mubr.bf16.gmra.mxu0 %v533
    %v568 = vpop.f32.mrf.mxu0
    %v569 = vadd.f32 0.0, %v568
    %v570 = vpop.f32.mrf.mxu0
    %v571 = vadd.f32 0.0, %v570
    %v572 = vpop.f32.mrf.mxu0
    %v573 = vpop.f32.mrf.mxu0
    %574 = vdwg.mxu0
    %575 = vmatprep.subr.bf16.mxu0 0
    %576 = vmatpush1.bf16.msra.mxu0 %v402
    %577 = vmatprep.subr.bf16.mxu0 0
    %578 = vmatpush1.bf16.msra.mxu0 %v399
    %579 = vmatprep.subr.bf16.mxu0 0
    %580 = vmatpush1.bf16.msra.mxu0 %v396
    %581 = vmatprep.subr.bf16.mxu0 0
    %582 = vmatpush1.bf16.msra.mxu0 %v393
    %583 = vmatprep.subr.bf16.mxu0 0
    %584 = vmatpush1.bf16.msra.mxu0 %v390
    %585 = vmatprep.subr.bf16.mxu0 0
    %586 = vmatpush1.bf16.msra.mxu0 %v387
    %587 = vmatprep.subr.bf16.mxu0 0
    %588 = vmatpush1.bf16.msra.mxu0 %v384
    %589 = vmatprep.subr.bf16.mxu0 0
    %590 = vmatpush1.bf16.msra.mxu0 %v381
    %591 = vmatprep.subr.bf16.mxu0 0
    %592 = vmatpush2.bf16.msra.mxu0 0
    %593 = vmatprep.subr.bf16.mxu0 0
    %594 = vmatpush2.bf16.msra.mxu0 0
    %595 = vmatprep.subr.bf16.mxu0 0
    %596 = vmatpush2.bf16.msra.mxu0 0
    %597 = vmatprep.subr.bf16.mxu0 0
    %598 = vmatpush2.bf16.msra.mxu0 0
    %599 = vmatprep.subr.bf16.mxu0 0
    %600 = vmatpush2.bf16.msra.mxu0 0
    %601 = vmatprep.subr.bf16.mxu0 0
    %602 = vmatpush2.bf16.msra.mxu0 0
    %603 = vmatprep.subr.bf16.mxu0 0
    %604 = vmatpush2.bf16.msra.mxu0 0
    %605 = vmatprep.subr.bf16.mxu0 0
    %606 = vmatpush2.bf16.msra.mxu0 0
    %607 = vmatprep.mubr.bf16.mxu0 0
    %608 = vmatmul.mubr.bf16.gmra.mxu0 %v533
    %v609 = vpop.f32.mrf.mxu0
    %v610 = vadd.f32 0.0, %v609
    %v611 = vpop.f32.mrf.mxu0
    %v612 = vpop.f32.mrf.mxu0
    %v613 = vpop.f32.mrf.mxu0
    %614 = vdwg.mxu0
    %v615 = vadd.f32 %v530, %v569
    %v616 = vxor.u32 %v615, 2147483648
    %v617 = vmul.f32 %v616, 1.442695
    %v618 = vpow.pop %v617
    %v619 = vadd.f32 %v618, 1.0
    %v620 = vrcp.pop %v619
    %v621 = vmul.f32 1.0, %v620
    %v622 = vadd.f32 %v531, %v571
    %v623 = vxor.u32 %v622, 2147483648
    %v624 = vmul.f32 %v623, 1.442695
    %v625 = vpow.pop %v624
    %v626 = vadd.f32 %v625, 1.0
    %v627 = vrcp.pop %v626
    %v628 = vmul.f32 1.0, %v627
    %v629 = vadd.f32 %v610, %v293
    %v630 = vmul.f32 %v621, %v629
    %v631 = vadd.f32 %v532, %v630
    %v632 = vtanh.pop %v631
    %v633 = vsub.f32 1.0, %v628
    %v634 = vmul.f32 %v633, %v632
    %v635 = vmul.f32 %v628, %v529
    %v636 = vadd.f32 %v634, %v635
    %v637 = vld [vmem:[#allocation2 + $0x30] sm:$0xff]
    %v638 = vld [vmem:[#allocation2 + $0x38] sm:$0xff]
    %v639 = vld [vmem:[#allocation2 + $0x40] sm:$0xff]
    %v640 = vpack.c.bf16 %v636, %v636
    %641 = vmatprep.subr.bf16.mxu0 %v401
    %642 = vmatpush1.bf16.msra.mxu0 %v400
    %643 = vmatprep.subr.bf16.mxu0 %v398
    %644 = vmatpush1.bf16.msra.mxu0 %v397
    %645 = vmatprep.subr.bf16.mxu0 %v395
    %646 = vmatpush1.bf16.msra.mxu0 %v394
    %647 = vmatprep.subr.bf16.mxu0 %v392
    %648 = vmatpush1.bf16.msra.mxu0 %v391
    %649 = vmatprep.subr.bf16.mxu0 %v389
    %650 = vmatpush1.bf16.msra.mxu0 %v388
    %651 = vmatprep.subr.bf16.mxu0 %v386
    %652 = vmatpush1.bf16.msra.mxu0 %v385
    %653 = vmatprep.subr.bf16.mxu0 %v383
    %654 = vmatpush1.bf16.msra.mxu0 %v382
    %655 = vmatprep.subr.bf16.mxu0 %v380
    %656 = vmatpush1.bf16.msra.mxu0 %v379
    %657 = vmatprep.subr.bf16.mxu0 0
    %658 = vmatpush2.bf16.msra.mxu0 0
    %659 = vmatprep.subr.bf16.mxu0 0
    %660 = vmatpush2.bf16.msra.mxu0 0
    %661 = vmatprep.subr.bf16.mxu0 0
    %662 = vmatpush2.bf16.msra.mxu0 0
    %663 = vmatprep.subr.bf16.mxu0 0
    %664 = vmatpush2.bf16.msra.mxu0 0
    %665 = vmatprep.subr.bf16.mxu0 0
    %666 = vmatpush2.bf16.msra.mxu0 0
    %667 = vmatprep.subr.bf16.mxu0 0
    %668 = vmatpush2.bf16.msra.mxu0 0
    %669 = vmatprep.subr.bf16.mxu0 0
    %670 = vmatpush2.bf16.msra.mxu0 0
    %671 = vmatprep.subr.bf16.mxu0 0
    %672 = vmatpush2.bf16.msra.mxu0 0
    %673 = vmatprep.mubr.bf16.mxu0 0
    %674 = vmatmul.mubr.bf16.gmra.mxu0 %v640
    %v675 = vpop.f32.mrf.mxu0
    %v676 = vadd.f32 0.0, %v675
    %v677 = vpop.f32.mrf.mxu0
    %v678 = vadd.f32 0.0, %v677
    %v679 = vpop.f32.mrf.mxu0
    %v680 = vpop.f32.mrf.mxu0
    %681 = vdwg.mxu0
    %682 = vmatprep.subr.bf16.mxu0 0
    %683 = vmatpush1.bf16.msra.mxu0 %v402
    %684 = vmatprep.subr.bf16.mxu0 0
    %685 = vmatpush1.bf16.msra.mxu0 %v399
    %686 = vmatprep.subr.bf16.mxu0 0
    %687 = vmatpush1.bf16.msra.mxu0 %v396
    %688 = vmatprep.subr.bf16.mxu0 0
    %689 = vmatpush1.bf16.msra.mxu0 %v393
    %690 = vmatprep.subr.bf16.mxu0 0
    %691 = vmatpush1.bf16.msra.mxu0 %v390
    %692 = vmatprep.subr.bf16.mxu0 0
    %693 = vmatpush1.bf16.msra.mxu0 %v387
    %694 = vmatprep.subr.bf16.mxu0 0
    %695 = vmatpush1.bf16.msra.mxu0 %v384
    %696 = vmatprep.subr.bf16.mxu0 0
    %697 = vmatpush1.bf16.msra.mxu0 %v381
    %698 = vmatprep.subr.bf16.mxu0 0
    %699 = vmatpush2.bf16.msra.mxu0 0
    %700 = vmatprep.subr.bf16.mxu0 0
    %701 = vmatpush2.bf16.msra.mxu0 0
    %702 = vmatprep.subr.bf16.mxu0 0
    %703 = vmatpush2.bf16.msra.mxu0 0
    %704 = vmatprep.subr.bf16.mxu0 0
    %705 = vmatpush2.bf16.msra.mxu0 0
    %706 = vmatprep.subr.bf16.mxu0 0
    %707 = vmatpush2.bf16.msra.mxu0 0
    %708 = vmatprep.subr.bf16.mxu0 0
    %709 = vmatpush2.bf16.msra.mxu0 0
    %710 = vmatprep.subr.bf16.mxu0 0
    %711 = vmatpush2.bf16.msra.mxu0 0
    %712 = vmatprep.subr.bf16.mxu0 0
    %713 = vmatpush2.bf16.msra.mxu0 0
    %714 = vmatprep.mubr.bf16.mxu0 0
    %715 = vmatmul.mubr.bf16.gmra.mxu0 %v640
    %v716 = vpop.f32.mrf.mxu0
    %v717 = vadd.f32 0.0, %v716
    %v718 = vpop.f32.mrf.mxu0
    %v719 = vpop.f32.mrf.mxu0
    %v720 = vpop.f32.mrf.mxu0
    %721 = vdwg.mxu0
    %v722 = vadd.f32 %v637, %v676
    %v723 = vxor.u32 %v722, 2147483648
    %v724 = vmul.f32 %v723, 1.442695
    %v725 = vpow.pop %v724
    %v726 = vadd.f32 %v725, 1.0
    %v727 = vrcp.pop %v726
    %v728 = vmul.f32 1.0, %v727
    %v729 = vadd.f32 %v638, %v678
    %v730 = vxor.u32 %v729, 2147483648
    %v731 = vmul.f32 %v730, 1.442695
    %v732 = vpow.pop %v731
    %v733 = vadd.f32 %v732, 1.0
    %v734 = vrcp.pop %v733
    %v735 = vmul.f32 1.0, %v734
    %v736 = vadd.f32 %v717, %v293
    %v737 = vmul.f32 %v728, %v736
    %v738 = vadd.f32 %v639, %v737
    %v739 = vtanh.pop %v738
    %v740 = vsub.f32 1.0, %v735
    %v741 = vmul.f32 %v740, %v739
    %v742 = vmul.f32 %v735, %v636
    %v743 = vadd.f32 %v741, %v742
    %v744 = vld [vmem:[#allocation2 + $0x48] sm:$0xff]
    %v745 = vld [vmem:[#allocation2 + $0x50] sm:$0xff]
    %v746 = vld [vmem:[#allocation2 + $0x58] sm:$0xff]
    %v747 = vpack.c.bf16 %v743, %v743
    %748 = vmatprep.subr.bf16.mxu0 %v401
    %749 = vmatpush1.bf16.msra.mxu0 %v400
    %750 = vmatprep.subr.bf16.mxu0 %v398
    %751 = vmatpush1.bf16.msra.mxu0 %v397
    %752 = vmatprep.subr.bf16.mxu0 %v395
    %753 = vmatpush1.bf16.msra.mxu0 %v394
    %754 = vmatprep.subr.bf16.mxu0 %v392
    %755 = vmatpush1.bf16.msra.mxu0 %v391
    %756 = vmatprep.subr.bf16.mxu0 %v389
    %757 = vmatpush1.bf16.msra.mxu0 %v388
    %758 = vmatprep.subr.bf16.mxu0 %v386
    %759 = vmatpush1.bf16.msra.mxu0 %v385
    %760 = vmatprep.subr.bf16.mxu0 %v383
    %761 = vmatpush1.bf16.msra.mxu0 %v382
    %762 = vmatprep.subr.bf16.mxu0 %v380
    %763 = vmatpush1.bf16.msra.mxu0 %v379
    %764 = vmatprep.subr.bf16.mxu0 0
    %765 = vmatpush2.bf16.msra.mxu0 0
    %766 = vmatprep.subr.bf16.mxu0 0
    %767 = vmatpush2.bf16.msra.mxu0 0
    %768 = vmatprep.subr.bf16.mxu0 0
    %769 = vmatpush2.bf16.msra.mxu0 0
    %770 = vmatprep.subr.bf16.mxu0 0
    %771 = vmatpush2.bf16.msra.mxu0 0
    %772 = vmatprep.subr.bf16.mxu0 0
    %773 = vmatpush2.bf16.msra.mxu0 0
    %774 = vmatprep.subr.bf16.mxu0 0
    %775 = vmatpush2.bf16.msra.mxu0 0
    %776 = vmatprep.subr.bf16.mxu0 0
    %777 = vmatpush2.bf16.msra.mxu0 0
    %778 = vmatprep.subr.bf16.mxu0 0
    %779 = vmatpush2.bf16.msra.mxu0 0
    %780 = vmatprep.mubr.bf16.mxu0 0
    %781 = vmatmul.mubr.bf16.gmra.mxu0 %v747
    %v782 = vpop.f32.mrf.mxu0
    %v783 = vadd.f32 0.0, %v782
    %v784 = vpop.f32.mrf.mxu0
    %v785 = vadd.f32 0.0, %v784
    %v786 = vpop.f32.mrf.mxu0
    %v787 = vpop.f32.mrf.mxu0
    %788 = vdwg.mxu0
    %789 = vmatprep.subr.bf16.mxu0 0
    %790 = vmatpush1.bf16.msra.mxu0 %v402
    %791 = vmatprep.subr.bf16.mxu0 0
    %792 = vmatpush1.bf16.msra.mxu0 %v399
    %793 = vmatprep.subr.bf16.mxu0 0
    %794 = vmatpush1.bf16.msra.mxu0 %v396
    %795 = vmatprep.subr.bf16.mxu0 0
    %796 = vmatpush1.bf16.msra.mxu0 %v393
    %797 = vmatprep.subr.bf16.mxu0 0
    %798 = vmatpush1.bf16.msra.mxu0 %v390
    %799 = vmatprep.subr.bf16.mxu0 0
    %800 = vmatpush1.bf16.msra.mxu0 %v387
    %801 = vmatprep.subr.bf16.mxu0 0
    %802 = vmatpush1.bf16.msra.mxu0 %v384
    %803 = vmatprep.subr.bf16.mxu0 0
    %804 = vmatpush1.bf16.msra.mxu0 %v381
    %805 = vmatprep.subr.bf16.mxu0 0
    %806 = vmatpush2.bf16.msra.mxu0 0
    %807 = vmatprep.subr.bf16.mxu0 0
    %808 = vmatpush2.bf16.msra.mxu0 0
    %809 = vmatprep.subr.bf16.mxu0 0
    %810 = vmatpush2.bf16.msra.mxu0 0
    %811 = vmatprep.subr.bf16.mxu0 0
    %812 = vmatpush2.bf16.msra.mxu0 0
    %813 = vmatprep.subr.bf16.mxu0 0
    %814 = vmatpush2.bf16.msra.mxu0 0
    %815 = vmatprep.subr.bf16.mxu0 0
    %816 = vmatpush2.bf16.msra.mxu0 0
    %817 = vmatprep.subr.bf16.mxu0 0
    %818 = vmatpush2.bf16.msra.mxu0 0
    %819 = vmatprep.subr.bf16.mxu0 0
    %820 = vmatpush2.bf16.msra.mxu0 0
    %821 = vmatprep.mubr.bf16.mxu0 0
    %822 = vmatmul.mubr.bf16.gmra.mxu0 %v747
    %v823 = vpop.f32.mrf.mxu0
    %v824 = vadd.f32 0.0, %v823
    %v825 = vpop.f32.mrf.mxu0
    %v826 = vpop.f32.mrf.mxu0
    %v827 = vpop.f32.mrf.mxu0
    %828 = vdwg.mxu0
    %v829 = vadd.f32 %v744, %v783
    %v830 = vxor.u32 %v829, 2147483648
    %v831 = vmul.f32 %v830, 1.442695
    %v832 = vpow.pop %v831
    %v833 = vadd.f32 %v832, 1.0
    %v834 = vrcp.pop %v833
    %v835 = vmul.f32 1.0, %v834
    %v836 = vadd.f32 %v745, %v785
    %v837 = vxor.u32 %v836, 2147483648
    %v838 = vmul.f32 %v837, 1.442695
    %v839 = vpow.pop %v838
    %v840 = vadd.f32 %v839, 1.0
    %v841 = vrcp.pop %v840
    %v842 = vmul.f32 1.0, %v841
    %v843 = vadd.f32 %v824, %v293
    %v844 = vmul.f32 %v835, %v843
    %v845 = vadd.f32 %v746, %v844
    %v846 = vtanh.pop %v845
    %v847 = vsub.f32 1.0, %v842
    %v848 = vmul.f32 %v847, %v846
    %v849 = vmul.f32 %v842, %v743
    %v850 = vadd.f32 %v848, %v849
    %v851 = vld [vmem:[#allocation2 + $0x60] sm:$0xff]
    %v852 = vld [vmem:[#allocation2 + $0x68] sm:$0xff]
    %v853 = vld [vmem:[#allocation2 + $0x70] sm:$0xff]
    %v854 = vpack.c.bf16 %v850, %v850
    %855 = vmatprep.subr.bf16.mxu0 %v401
    %856 = vmatpush1.bf16.msra.mxu0 %v400
    %857 = vmatprep.subr.bf16.mxu0 %v398
    %858 = vmatpush1.bf16.msra.mxu0 %v397
    %859 = vmatprep.subr.bf16.mxu0 %v395
    %860 = vmatpush1.bf16.msra.mxu0 %v394
    %861 = vmatprep.subr.bf16.mxu0 %v392
    %862 = vmatpush1.bf16.msra.mxu0 %v391
    %863 = vmatprep.subr.bf16.mxu0 %v389
    %864 = vmatpush1.bf16.msra.mxu0 %v388
    %865 = vmatprep.subr.bf16.mxu0 %v386
    %866 = vmatpush1.bf16.msra.mxu0 %v385
    %867 = vmatprep.subr.bf16.mxu0 %v383
    %868 = vmatpush1.bf16.msra.mxu0 %v382
    %869 = vmatprep.subr.bf16.mxu0 %v380
    %870 = vmatpush1.bf16.msra.mxu0 %v379
    %871 = vmatprep.subr.bf16.mxu0 0
    %872 = vmatpush2.bf16.msra.mxu0 0
    %873 = vmatprep.subr.bf16.mxu0 0
    %874 = vmatpush2.bf16.msra.mxu0 0
    %875 = vmatprep.subr.bf16.mxu0 0
    %876 = vmatpush2.bf16.msra.mxu0 0
    %877 = vmatprep.subr.bf16.mxu0 0
    %878 = vmatpush2.bf16.msra.mxu0 0
    %879 = vmatprep.subr.bf16.mxu0 0
    %880 = vmatpush2.bf16.msra.mxu0 0
    %881 = vmatprep.subr.bf16.mxu0 0
    %882 = vmatpush2.bf16.msra.mxu0 0
    %883 = vmatprep.subr.bf16.mxu0 0
    %884 = vmatpush2.bf16.msra.mxu0 0
    %885 = vmatprep.subr.bf16.mxu0 0
    %886 = vmatpush2.bf16.msra.mxu0 0
    %887 = vmatprep.mubr.bf16.mxu0 0
    %888 = vmatmul.mubr.bf16.gmra.mxu0 %v854
    %v889 = vpop.f32.mrf.mxu0
    %v890 = vadd.f32 0.0, %v889
    %v891 = vpop.f32.mrf.mxu0
    %v892 = vadd.f32 0.0, %v891
    %v893 = vpop.f32.mrf.mxu0
    %v894 = vpop.f32.mrf.mxu0
    %895 = vdwg.mxu0
    %896 = vmatprep.subr.bf16.mxu0 0
    %897 = vmatpush1.bf16.msra.mxu0 %v402
    %898 = vmatprep.subr.bf16.mxu0 0
    %899 = vmatpush1.bf16.msra.mxu0 %v399
    %900 = vmatprep.subr.bf16.mxu0 0
    %901 = vmatpush1.bf16.msra.mxu0 %v396
    %902 = vmatprep.subr.bf16.mxu0 0
    %903 = vmatpush1.bf16.msra.mxu0 %v393
    %904 = vmatprep.subr.bf16.mxu0 0
    %905 = vmatpush1.bf16.msra.mxu0 %v390
    %906 = vmatprep.subr.bf16.mxu0 0
    %907 = vmatpush1.bf16.msra.mxu0 %v387
    %908 = vmatprep.subr.bf16.mxu0 0
    %909 = vmatpush1.bf16.msra.mxu0 %v384
    %910 = vmatprep.subr.bf16.mxu0 0
    %911 = vmatpush1.bf16.msra.mxu0 %v381
    %912 = vmatprep.subr.bf16.mxu0 0
    %913 = vmatpush2.bf16.msra.mxu0 0
    %914 = vmatprep.subr.bf16.mxu0 0
    %915 = vmatpush2.bf16.msra.mxu0 0
    %916 = vmatprep.subr.bf16.mxu0 0
    %917 = vmatpush2.bf16.msra.mxu0 0
    %918 = vmatprep.subr.bf16.mxu0 0
    %919 = vmatpush2.bf16.msra.mxu0 0
    %920 = vmatprep.subr.bf16.mxu0 0
    %921 = vmatpush2.bf16.msra.mxu0 0
    %922 = vmatprep.subr.bf16.mxu0 0
    %923 = vmatpush2.bf16.msra.mxu0 0
    %924 = vmatprep.subr.bf16.mxu0 0
    %925 = vmatpush2.bf16.msra.mxu0 0
    %926 = vmatprep.subr.bf16.mxu0 0
    %927 = vmatpush2.bf16.msra.mxu0 0
    %928 = vmatprep.mubr.bf16.mxu0 0
    %929 = vmatmul.mubr.bf16.gmra.mxu0 %v854
    %v930 = vpop.f32.mrf.mxu0
    %v931 = vadd.f32 0.0, %v930
    %v932 = vpop.f32.mrf.mxu0
    %v933 = vpop.f32.mrf.mxu0
    %v934 = vpop.f32.mrf.mxu0
    %935 = vdwg.mxu0
    %v936 = vadd.f32 %v851, %v890
    %v937 = vxor.u32 %v936, 2147483648
    %v938 = vmul.f32 %v937, 1.442695
    %v939 = vpow.pop %v938
    %v940 = vadd.f32 %v939, 1.0
    %v941 = vrcp.pop %v940
    %v942 = vmul.f32 1.0, %v941
    %v943 = vadd.f32 %v852, %v892
    %v944 = vxor.u32 %v943, 2147483648
    %v945 = vmul.f32 %v944, 1.442695
    %v946 = vpow.pop %v945
    %v947 = vadd.f32 %v946, 1.0
    %v948 = vrcp.pop %v947
    %v949 = vmul.f32 1.0, %v948
    %v950 = vadd.f32 %v931, %v293
    %v951 = vmul.f32 %v942, %v950
    %v952 = vadd.f32 %v853, %v951
    %v953 = vtanh.pop %v952
    %v954 = vsub.f32 1.0, %v949
    %v955 = vmul.f32 %v954, %v953
    %v956 = vmul.f32 %v949, %v850
    %v957 = vadd.f32 %v955, %v956
    %v958 = vld [vmem:[#allocation2 + $0x78] sm:$0xff]
    %v959 = vld [vmem:[#allocation2 + $0x80] sm:$0xff]
    %v960 = vld [vmem:[#allocation2 + $0x88] sm:$0xff]
    %v961 = vpack.c.bf16 %v957, %v957
    %962 = vmatprep.subr.bf16.mxu0 %v401
    %963 = vmatpush1.bf16.msra.mxu0 %v400
    %964 = vmatprep.subr.bf16.mxu0 %v398
    %965 = vmatpush1.bf16.msra.mxu0 %v397
    %966 = vmatprep.subr.bf16.mxu0 %v395
    %967 = vmatpush1.bf16.msra.mxu0 %v394
    %968 = vmatprep.subr.bf16.mxu0 %v392
    %969 = vmatpush1.bf16.msra.mxu0 %v391
    %970 = vmatprep.subr.bf16.mxu0 %v389
    %971 = vmatpush1.bf16.msra.mxu0 %v388
    %972 = vmatprep.subr.bf16.mxu0 %v386
    %973 = vmatpush1.bf16.msra.mxu0 %v385
    %974 = vmatprep.subr.bf16.mxu0 %v383
    %975 = vmatpush1.bf16.msra.mxu0 %v382
    %976 = vmatprep.subr.bf16.mxu0 %v380
    %977 = vmatpush1.bf16.msra.mxu0 %v379
    %978 = vmatprep.subr.bf16.mxu0 0
    %979 = vmatpush2.bf16.msra.mxu0 0
    %980 = vmatprep.subr.bf16.mxu0 0
    %981 = vmatpush2.bf16.msra.mxu0 0
    %982 = vmatprep.subr.bf16.mxu0 0
    %983 = vmatpush2.bf16.msra.mxu0 0
    %984 = vmatprep.subr.bf16.mxu0 0
    %985 = vmatpush2.bf16.msra.mxu0 0
    %986 = vmatprep.subr.bf16.mxu0 0
    %987 = vmatpush2.bf16.msra.mxu0 0
    %988 = vmatprep.subr.bf16.mxu0 0
    %989 = vmatpush2.bf16.msra.mxu0 0
    %990 = vmatprep.subr.bf16.mxu0 0
    %991 = vmatpush2.bf16.msra.mxu0 0
    %992 = vmatprep.subr.bf16.mxu0 0
    %993 = vmatpush2.bf16.msra.mxu0 0
    %994 = vmatprep.mubr.bf16.mxu0 0
    %995 = vmatmul.mubr.bf16.gmra.mxu0 %v961
    %v996 = vpop.f32.mrf.mxu0
    %v997 = vadd.f32 0.0, %v996
    %v998 = vpop.f32.mrf.mxu0
    %v999 = vadd.f32 0.0, %v998
    %v1000 = vpop.f32.mrf.mxu0
    %v1001 = vpop.f32.mrf.mxu0
    %1002 = vdwg.mxu0
    %1003 = vmatprep.subr.bf16.mxu0 0
    %1004 = vmatpush1.bf16.msra.mxu0 %v402
    %1005 = vmatprep.subr.bf16.mxu0 0
    %1006 = vmatpush1.bf16.msra.mxu0 %v399
    %1007 = vmatprep.subr.bf16.mxu0 0
    %1008 = vmatpush1.bf16.msra.mxu0 %v396
    %1009 = vmatprep.subr.bf16.mxu0 0
    %1010 = vmatpush1.bf16.msra.mxu0 %v393
    %1011 = vmatprep.subr.bf16.mxu0 0
    %1012 = vmatpush1.bf16.msra.mxu0 %v390
    %1013 = vmatprep.subr.bf16.mxu0 0
    %1014 = vmatpush1.bf16.msra.mxu0 %v387
    %1015 = vmatprep.subr.bf16.mxu0 0
    %1016 = vmatpush1.bf16.msra.mxu0 %v384
    %1017 = vmatprep.subr.bf16.mxu0 0
    %1018 = vmatpush1.bf16.msra.mxu0 %v381
    %1019 = vmatprep.subr.bf16.mxu0 0
    %1020 = vmatpush2.bf16.msra.mxu0 0
    %1021 = vmatprep.subr.bf16.mxu0 0
    %1022 = vmatpush2.bf16.msra.mxu0 0
    %1023 = vmatprep.subr.bf16.mxu0 0
    %1024 = vmatpush2.bf16.msra.mxu0 0
    %1025 = vmatprep.subr.bf16.mxu0 0
    %1026 = vmatpush2.bf16.msra.mxu0 0
    %1027 = vmatprep.subr.bf16.mxu0 0
    %1028 = vmatpush2.bf16.msra.mxu0 0
    %1029 = vmatprep.subr.bf16.mxu0 0
    %1030 = vmatpush2.bf16.msra.mxu0 0
    %1031 = vmatprep.subr.bf16.mxu0 0
    %1032 = vmatpush2.bf16.msra.mxu0 0
    %1033 = vmatprep.subr.bf16.mxu0 0
    %1034 = vmatpush2.bf16.msra.mxu0 0
    %1035 = vmatprep.mubr.bf16.mxu0 0
    %1036 = vmatmul.mubr.bf16.gmra.mxu0 %v961
    %v1037 = vpop.f32.mrf.mxu0
    %v1038 = vadd.f32 0.0, %v1037
    %v1039 = vpop.f32.mrf.mxu0
    %v1040 = vpop.f32.mrf.mxu0
    %v1041 = vpop.f32.mrf.mxu0
    %1042 = vdwg.mxu0
    %v1043 = vadd.f32 %v958, %v997
    %v1044 = vxor.u32 %v1043, 2147483648
    %v1045 = vmul.f32 %v1044, 1.442695
    %v1046 = vpow.pop %v1045
    %v1047 = vadd.f32 %v1046, 1.0
    %v1048 = vrcp.pop %v1047
    %v1049 = vmul.f32 1.0, %v1048
    %v1050 = vadd.f32 %v959, %v999
    %v1051 = vxor.u32 %v1050, 2147483648
    %v1052 = vmul.f32 %v1051, 1.442695
    %v1053 = vpow.pop %v1052
    %v1054 = vadd.f32 %v1053, 1.0
    %v1055 = vrcp.pop %v1054
    %v1056 = vmul.f32 1.0, %v1055
    %v1057 = vadd.f32 %v1038, %v293
    %v1058 = vmul.f32 %v1049, %v1057
    %v1059 = vadd.f32 %v960, %v1058
    %v1060 = vtanh.pop %v1059
    %v1061 = vsub.f32 1.0, %v1056
    %v1062 = vmul.f32 %v1061, %v1060
    %v1063 = vmul.f32 %v1056, %v957
    %v1064 = vadd.f32 %v1062, %v1063
    %v1065 = vld [vmem:[#allocation2 + $0x90] sm:$0xff]
    %v1066 = vld [vmem:[#allocation2 + $0x98] sm:$0xff]
    %v1067 = vld [vmem:[#allocation2 + $0xa0] sm:$0xff]
    %v1068 = vpack.c.bf16 %v1064, %v1064
    %1069 = vmatprep.subr.bf16.mxu0 %v401
    %1070 = vmatpush1.bf16.msra.mxu0 %v400
    %1071 = vmatprep.subr.bf16.mxu0 %v398
    %1072 = vmatpush1.bf16.msra.mxu0 %v397
    %1073 = vmatprep.subr.bf16.mxu0 %v395
    %1074 = vmatpush1.bf16.msra.mxu0 %v394
    %1075 = vmatprep.subr.bf16.mxu0 %v392
    %1076 = vmatpush1.bf16.msra.mxu0 %v391
    %1077 = vmatprep.subr.bf16.mxu0 %v389
    %1078 = vmatpush1.bf16.msra.mxu0 %v388
    %1079 = vmatprep.subr.bf16.mxu0 %v386
    %1080 = vmatpush1.bf16.msra.mxu0 %v385
    %1081 = vmatprep.subr.bf16.mxu0 %v383
    %1082 = vmatpush1.bf16.msra.mxu0 %v382
    %1083 = vmatprep.subr.bf16.mxu0 %v380
    %1084 = vmatpush1.bf16.msra.mxu0 %v379
    %1085 = vmatprep.subr.bf16.mxu0 0
    %1086 = vmatpush2.bf16.msra.mxu0 0
    %1087 = vmatprep.subr.bf16.mxu0 0
    %1088 = vmatpush2.bf16.msra.mxu0 0
    %1089 = vmatprep.subr.bf16.mxu0 0
    %1090 = vmatpush2.bf16.msra.mxu0 0
    %1091 = vmatprep.subr.bf16.mxu0 0
    %1092 = vmatpush2.bf16.msra.mxu0 0
    %1093 = vmatprep.subr.bf16.mxu0 0
    %1094 = vmatpush2.bf16.msra.mxu0 0
    %1095 = vmatprep.subr.bf16.mxu0 0
    %1096 = vmatpush2.bf16.msra.mxu0 0
    %1097 = vmatprep.subr.bf16.mxu0 0
    %1098 = vmatpush2.bf16.msra.mxu0 0
    %1099 = vmatprep.subr.bf16.mxu0 0
    %1100 = vmatpush2.bf16.msra.mxu0 0
    %1101 = vmatprep.mubr.bf16.mxu0 0
    %1102 = vmatmul.mubr.bf16.gmra.mxu0 %v1068
    %v1103 = vpop.f32.mrf.mxu0
    %v1104 = vadd.f32 0.0, %v1103
    %v1105 = vpop.f32.mrf.mxu0
    %v1106 = vadd.f32 0.0, %v1105
    %v1107 = vpop.f32.mrf.mxu0
    %v1108 = vpop.f32.mrf.mxu0
    %1109 = vdwg.mxu0
    %1110 = vmatprep.subr.bf16.mxu0 0
    %1111 = vmatpush1.bf16.msra.mxu0 %v402
    %1112 = vmatprep.subr.bf16.mxu0 0
    %1113 = vmatpush1.bf16.msra.mxu0 %v399
    %1114 = vmatprep.subr.bf16.mxu0 0
    %1115 = vmatpush1.bf16.msra.mxu0 %v396
    %1116 = vmatprep.subr.bf16.mxu0 0
    %1117 = vmatpush1.bf16.msra.mxu0 %v393
    %1118 = vmatprep.subr.bf16.mxu0 0
    %1119 = vmatpush1.bf16.msra.mxu0 %v390
    %1120 = vmatprep.subr.bf16.mxu0 0
    %1121 = vmatpush1.bf16.msra.mxu0 %v387
    %1122 = vmatprep.subr.bf16.mxu0 0
    %1123 = vmatpush1.bf16.msra.mxu0 %v384
    %1124 = vmatprep.subr.bf16.mxu0 0
    %1125 = vmatpush1.bf16.msra.mxu0 %v381
    %1126 = vmatprep.subr.bf16.mxu0 0
    %1127 = vmatpush2.bf16.msra.mxu0 0
    %1128 = vmatprep.subr.bf16.mxu0 0
    %1129 = vmatpush2.bf16.msra.mxu0 0
    %1130 = vmatprep.subr.bf16.mxu0 0
    %1131 = vmatpush2.bf16.msra.mxu0 0
    %1132 = vmatprep.subr.bf16.mxu0 0
    %1133 = vmatpush2.bf16.msra.mxu0 0
    %1134 = vmatprep.subr.bf16.mxu0 0
    %1135 = vmatpush2.bf16.msra.mxu0 0
    %1136 = vmatprep.subr.bf16.mxu0 0
    %1137 = vmatpush2.bf16.msra.mxu0 0
    %1138 = vmatprep.subr.bf16.mxu0 0
    %1139 = vmatpush2.bf16.msra.mxu0 0
    %1140 = vmatprep.subr.bf16.mxu0 0
    %1141 = vmatpush2.bf16.msra.mxu0 0
    %1142 = vmatprep.mubr.bf16.mxu0 0
    %1143 = vmatmul.mubr.bf16.gmra.mxu0 %v1068
    %v1144 = vpop.f32.mrf.mxu0
    %v1145 = vadd.f32 0.0, %v1144
    %v1146 = vpop.f32.mrf.mxu0
    %v1147 = vpop.f32.mrf.mxu0
    %v1148 = vpop.f32.mrf.mxu0
    %1149 = vdwg.mxu0
    %v1150 = vadd.f32 %v1065, %v1104
    %v1151 = vxor.u32 %v1150, 2147483648
    %v1152 = vmul.f32 %v1151, 1.442695
    %v1153 = vpow.pop %v1152
    %v1154 = vadd.f32 %v1153, 1.0
    %v1155 = vrcp.pop %v1154
    %v1156 = vmul.f32 1.0, %v1155
    %v1157 = vadd.f32 %v1066, %v1106
    %v1158 = vxor.u32 %v1157, 2147483648
    %v1159 = vmul.f32 %v1158, 1.442695
    %v1160 = vpow.pop %v1159
    %v1161 = vadd.f32 %v1160, 1.0
    %v1162 = vrcp.pop %v1161
    %v1163 = vmul.f32 1.0, %v1162
    %v1164 = vadd.f32 %v1145, %v293
    %v1165 = vmul.f32 %v1156, %v1164
    %v1166 = vadd.f32 %v1067, %v1165
    %v1167 = vtanh.pop %v1166
    %v1168 = vsub.f32 1.0, %v1163
    %v1169 = vmul.f32 %v1168, %v1167
    %v1170 = vmul.f32 %v1163, %v1064
    %v1171 = vadd.f32 %v1169, %v1170
    %v1172 = vld [vmem:[#allocation2 + $0xa8] sm:$0xff]
    %v1173 = vld [vmem:[#allocation2 + $0xb0] sm:$0xff]
    %v1174 = vld [vmem:[#allocation2 + $0xb8] sm:$0xff]
    %v1175 = vpack.c.bf16 %v1171, %v1171
    %1176 = vmatprep.subr.bf16.mxu0 %v401
    %1177 = vmatpush1.bf16.msra.mxu0 %v400
    %1178 = vmatprep.subr.bf16.mxu0 %v398
    %1179 = vmatpush1.bf16.msra.mxu0 %v397
    %1180 = vmatprep.subr.bf16.mxu0 %v395
    %1181 = vmatpush1.bf16.msra.mxu0 %v394
    %1182 = vmatprep.subr.bf16.mxu0 %v392
    %1183 = vmatpush1.bf16.msra.mxu0 %v391
    %1184 = vmatprep.subr.bf16.mxu0 %v389
    %1185 = vmatpush1.bf16.msra.mxu0 %v388
    %1186 = vmatprep.subr.bf16.mxu0 %v386
    %1187 = vmatpush1.bf16.msra.mxu0 %v385
    %1188 = vmatprep.subr.bf16.mxu0 %v383
    %1189 = vmatpush1.bf16.msra.mxu0 %v382
    %1190 = vmatprep.subr.bf16.mxu0 %v380
    %1191 = vmatpush1.bf16.msra.mxu0 %v379
    %1192 = vmatprep.subr.bf16.mxu0 0
    %1193 = vmatpush2.bf16.msra.mxu0 0
    %1194 = vmatprep.subr.bf16.mxu0 0
    %1195 = vmatpush2.bf16.msra.mxu0 0
    %1196 = vmatprep.subr.bf16.mxu0 0
    %1197 = vmatpush2.bf16.msra.mxu0 0
    %1198 = vmatprep.subr.bf16.mxu0 0
    %1199 = vmatpush2.bf16.msra.mxu0 0
    %1200 = vmatprep.subr.bf16.mxu0 0
    %1201 = vmatpush2.bf16.msra.mxu0 0
    %1202 = vmatprep.subr.bf16.mxu0 0
    %1203 = vmatpush2.bf16.msra.mxu0 0
    %1204 = vmatprep.subr.bf16.mxu0 0
    %1205 = vmatpush2.bf16.msra.mxu0 0
    %1206 = vmatprep.subr.bf16.mxu0 0
    %1207 = vmatpush2.bf16.msra.mxu0 0
    %1208 = vmatprep.mubr.bf16.mxu0 0
    %1209 = vmatmul.mubr.bf16.gmra.mxu0 %v1175
    %v1210 = vpop.f32.mrf.mxu0
    %v1211 = vadd.f32 0.0, %v1210
    %v1212 = vpop.f32.mrf.mxu0
    %v1213 = vadd.f32 0.0, %v1212
    %v1214 = vpop.f32.mrf.mxu0
    %v1215 = vpop.f32.mrf.mxu0
    %1216 = vdwg.mxu0
    %1217 = vmatprep.subr.bf16.mxu0 0
    %1218 = vmatpush1.bf16.msra.mxu0 %v402
    %1219 = vmatprep.subr.bf16.mxu0 0
    %1220 = vmatpush1.bf16.msra.mxu0 %v399
    %1221 = vmatprep.subr.bf16.mxu0 0
    %1222 = vmatpush1.bf16.msra.mxu0 %v396
    %1223 = vmatprep.subr.bf16.mxu0 0
    %1224 = vmatpush1.bf16.msra.mxu0 %v393
    %1225 = vmatprep.subr.bf16.mxu0 0
    %1226 = vmatpush1.bf16.msra.mxu0 %v390
    %1227 = vmatprep.subr.bf16.mxu0 0
    %1228 = vmatpush1.bf16.msra.mxu0 %v387
    %1229 = vmatprep.subr.bf16.mxu0 0
    %1230 = vmatpush1.bf16.msra.mxu0 %v384
    %1231 = vmatprep.subr.bf16.mxu0 0
    %1232 = vmatpush1.bf16.msra.mxu0 %v381
    %1233 = vmatprep.subr.bf16.mxu0 0
    %1234 = vmatpush2.bf16.msra.mxu0 0
    %1235 = vmatprep.subr.bf16.mxu0 0
    %1236 = vmatpush2.bf16.msra.mxu0 0
    %1237 = vmatprep.subr.bf16.mxu0 0
    %1238 = vmatpush2.bf16.msra.mxu0 0
    %1239 = vmatprep.subr.bf16.mxu0 0
    %1240 = vmatpush2.bf16.msra.mxu0 0
    %1241 = vmatprep.subr.bf16.mxu0 0
    %1242 = vmatpush2.bf16.msra.mxu0 0
    %1243 = vmatprep.subr.bf16.mxu0 0
    %1244 = vmatpush2.bf16.msra.mxu0 0
    %1245 = vmatprep.subr.bf16.mxu0 0
    %1246 = vmatpush2.bf16.msra.mxu0 0
    %1247 = vmatprep.subr.bf16.mxu0 0
    %1248 = vmatpush2.bf16.msra.mxu0 0
    %1249 = vmatprep.mubr.bf16.mxu0 0
    %1250 = vmatmul.mubr.bf16.gmra.mxu0 %v1175
    %v1251 = vpop.f32.mrf.mxu0
    %v1252 = vadd.f32 0.0, %v1251
    %v1253 = vpop.f32.mrf.mxu0
    %v1254 = vpop.f32.mrf.mxu0
    %v1255 = vpop.f32.mrf.mxu0
    %1256 = vdwg.mxu0
    %v1257 = vadd.f32 %v1172, %v1211
    %v1258 = vxor.u32 %v1257, 2147483648
    %v1259 = vmul.f32 %v1258, 1.442695
    %v1260 = vpow.pop %v1259
    %v1261 = vadd.f32 %v1260, 1.0
    %v1262 = vrcp.pop %v1261
    %v1263 = vmul.f32 1.0, %v1262
    %v1264 = vadd.f32 %v1173, %v1213
    %v1265 = vxor.u32 %v1264, 2147483648
    %v1266 = vmul.f32 %v1265, 1.442695
    %v1267 = vpow.pop %v1266
    %v1268 = vadd.f32 %v1267, 1.0
    %v1269 = vrcp.pop %v1268
    %v1270 = vmul.f32 1.0, %v1269
    %v1271 = vadd.f32 %v1252, %v293
    %v1272 = vmul.f32 %v1263, %v1271
    %v1273 = vadd.f32 %v1174, %v1272
    %v1274 = vtanh.pop %v1273
    %v1275 = vsub.f32 1.0, %v1270
    %v1276 = vmul.f32 %v1275, %v1274
    %v1277 = vmul.f32 %v1270, %v1171
    %v1278 = vadd.f32 %v1276, %v1277
    %v1280 = vlaneseq
    %v1281 = vshrl.u32 %v1280, 7
    %v1282 = vsub.s32 0, %v1281
    %v1283 = vrot.slane %v295, %v1282
    %v1285 = vmul.f32 %v1278, %v1283
    %1286 = vadd.xlane.f32.xlu0 %v1285
    %v1287 = vpop.xlane.xlu0 %1286
    %s1288 = sld [smem:[#allocation3]]
    %v1289 = vstv %s1288
    %v1290 = vadd.f32 %v1287, %v1289
    %vm1291 = vcmask 7168
    %1292 = vst.msk [vmem:[%s6] sm:$0xff] %vm1291, %v1290
    // Predicated region
    $region30: #{gru_model_forward.1} parent=1 // pred_check
      _
    $region31: #{gru_model_forward.1} parent=1 // pred_check_branch
      %1294 = sbr.rel (0) target = $region33
    $region32: #{gru_model_forward.1} parent=1 // pred_region
      _
    $region33: #{gru_model_forward.1} parent=1 // pred_fallthru
      _
    // Predicated region
    $region34: #{gru_model_forward.1} parent=1 // pred_check
      _
    $region35: #{gru_model_forward.1} parent=1 // pred_check_branch
      %1296 = sbr.rel (0) target = $region37
    $region36: #{gru_model_forward.1} parent=1 // pred_region
      _
    $region37: #{gru_model_forward.1} parent=1 // pred_fallthru
      _
    %1297 = vsyncpa [#allocation5], 1

</llo_original>
